<compile_context>
chip_gen: v5e
topology: v5e:2x2
jax: 0.10.0
libtpu: 0.0.40
codegen_flags: <defaults>
</compile_context>

<pallas_src>
import jax
import jax.numpy as jnp
from jax.experimental import pallas as pl
from jax.experimental.pallas import tpu as pltpu
import numpy as np

IN_DIM = 121
HIDDEN = 128
HALF = HIDDEN // 2      # 64
LATENT_DIM = 16
NEG_SLOPE = 0.1


def _leaky_relu(x):
    # LeakyReLU(0.1): max(x, 0.1*x) is exact for slope in (0, 1).
    return jnp.maximum(x, NEG_SLOPE * x)


def dnnvae_kernel(x_ref, eps_ref,
                  we1_ref, be1_ref, we2_ref, be2_ref, we3_ref, be3_ref,
                  wm_ref, bm_ref, wv_ref, bv_ref,
                  wd1_ref, bd1_ref, wd2_ref, bd2_ref, wd3_ref, bd3_ref,
                  enc_ref, mean_ref, var_ref, dec_ref):
    x = x_ref[...].astype(jnp.float32)                              # (TB, 121)

    # ---------------- encoder (dropout = identity, eval mode) ----------------
    h = _leaky_relu(jnp.dot(x, we1_ref[...],
                            preferred_element_type=jnp.float32) + be1_ref[...])
    h = _leaky_relu(jnp.dot(h, we2_ref[...],
                            preferred_element_type=jnp.float32) + be2_ref[...])
    h = _leaky_relu(jnp.dot(h, we3_ref[...],
                            preferred_element_type=jnp.float32) + be3_ref[...])  # (TB, 64)

    # ---------------- latent heads ----------------
    mu = jnp.dot(h, wm_ref[...], preferred_element_type=jnp.float32) + bm_ref[...]
    logvar = jnp.dot(h, wv_ref[...], preferred_element_type=jnp.float32) + bv_ref[...]

    # ---------------- reparameterize: z = mu + eps * exp(logvar / 2) ----------------
    z = mu + eps_ref[...].astype(jnp.float32) * jnp.exp(logvar * 0.5)

    # ---------------- decoder ----------------
    d = _leaky_relu(jnp.dot(z, wd1_ref[...],
                            preferred_element_type=jnp.float32) + bd1_ref[...])
    d = _leaky_relu(jnp.dot(d, wd2_ref[...],
                            preferred_element_type=jnp.float32) + bd2_ref[...])
    d = jax.nn.sigmoid(jnp.dot(d, wd3_ref[...],
                               preferred_element_type=jnp.float32) + bd3_ref[...])  # (TB, 121)

    enc_ref[...] = z.astype(enc_ref.dtype)
    mean_ref[...] = mu.astype(mean_ref.dtype)
    var_ref[...] = logvar.astype(var_ref.dtype)
    dec_ref[...] = d.astype(dec_ref.dtype)


def dnnvae_forward_pallas(x, eps, params, *, tb=128):
    """Fused DNNVAE forward.  x: (B, 121) f32, eps: (B, latent) f32.

    Returns (encoded, latent_mean, latent_var, decoded)."""
    B = x.shape[0]
    tb = min(tb, B)
    assert B % tb == 0, "batch must be divisible by the batch tile"
    assert tb % 8 == 0 or tb == B, "batch tile must be sublane-aligned"
    grid = (pl.cdiv(B, tb),)

    (we1, be1, we2, be2, we3, be3, wm, bm, wv, bv,
     wd1, bd1, wd2, bd2, wd3, bd3) = params

    def batch_spec(n):
        return pl.BlockSpec((tb, n), lambda i: (i, 0))

    def resident_spec(arr):
        return pl.BlockSpec(arr.shape, lambda i: (0, 0))

    in_specs = [
        batch_spec(IN_DIM),                 # x
        batch_spec(LATENT_DIM),             # eps
        resident_spec(we1), resident_spec(be1),
        resident_spec(we2), resident_spec(be2),
        resident_spec(we3), resident_spec(be3),
        resident_spec(wm), resident_spec(bm),
        resident_spec(wv), resident_spec(bv),
        resident_spec(wd1), resident_spec(bd1),
        resident_spec(wd2), resident_spec(bd2),
        resident_spec(wd3), resident_spec(bd3),
    ]
    out_specs = (
        batch_spec(LATENT_DIM),             # encoded
        batch_spec(LATENT_DIM),             # latent_mean
        batch_spec(LATENT_DIM),             # latent_var
        batch_spec(IN_DIM),                 # decoded
    )
    out_shape = (
        jax.ShapeDtypeStruct((B, LATENT_DIM), jnp.float32),
        jax.ShapeDtypeStruct((B, LATENT_DIM), jnp.float32),
        jax.ShapeDtypeStruct((B, LATENT_DIM), jnp.float32),
        jax.ShapeDtypeStruct((B, IN_DIM), jnp.float32),
    )

    return pl.pallas_call(
        dnnvae_kernel,
        grid=grid,
        in_specs=in_specs,
        out_specs=out_specs,
        out_shape=out_shape,
        compiler_params=pltpu.CompilerParams(
            dimension_semantics=("parallel",)),
    )(x, eps, we1, be1, we2, be2, we3, be3, wm, bm, wv, bv,
      wd1, bd1, wd2, bd2, wd3, bd3)


# ---------------- parameter construction + pure-JAX reference ----------------

def make_params(key):
    """Deterministic Linear weights stored as (in, out) plus (1, out) biases."""
    dims = [
        (IN_DIM, HIDDEN),       # encoder layer 0
        (HIDDEN, HIDDEN),       # encoder layer 1
        (HIDDEN, HALF),         # encoder layer 2
        (HALF, LATENT_DIM),     # latent_mean
        (HALF, LATENT_DIM),     # latent_var
        (LATENT_DIM, HALF),     # decoder layer 0
        (HALF, HIDDEN),         # decoder layer 1
        (HIDDEN, IN_DIM),       # decoder layer 2
    ]
    params = []
    for din, dout in dims:
        key, kw, kb = jax.random.split(key, 3)
        scale = 1.0 / np.sqrt(din)
        w = jax.random.uniform(kw, (din, dout), jnp.float32, -scale, scale)
        b = jax.random.uniform(kb, (1, dout), jnp.float32, -scale, scale)
        params += [w, b]
    return tuple(params)


def dnnvae_reference(x, eps, params):
    (we1, be1, we2, be2, we3, be3, wm, bm, wv, bv,
     wd1, bd1, wd2, bd2, wd3, bd3) = params
    lrelu = lambda v: jnp.where(v >= 0, v, NEG_SLOPE * v)

    h = lrelu(x @ we1 + be1)
    h = lrelu(h @ we2 + be2)
    h = lrelu(h @ we3 + be3)
    mu = h @ wm + bm
    logvar = h @ wv + bv
    z = mu + eps * jnp.exp(logvar / 2.0)
    d = lrelu(z @ wd1 + bd1)
    d = lrelu(d @ wd2 + bd2)
    d = jax.nn.sigmoid(d @ wd3 + bd3)
    return z, mu, logvar, d


if __name__ == "__main__":
    key = jax.random.PRNGKey(0)
    k_param, k_x, k_eps = jax.random.split(key, 3)

    B = 16                                   # small batch; tiled in chunks of 8
    params = make_params(k_param)
    x = jax.random.uniform(k_x, (B, IN_DIM), jnp.float32)
    eps = jax.random.normal(k_eps, (B, LATENT_DIM), jnp.float32)

    enc, mu, logvar, dec = dnnvae_forward_pallas(x, eps, params, tb=8)
    jax.block_until_ready((enc, mu, logvar, dec))

    enc_r, mu_r, lv_r, dec_r = dnnvae_reference(x, eps, params)
    for got, want in zip((enc, mu, logvar, dec), (enc_r, mu_r, lv_r, dec_r)):
        np.testing.assert_allclose(np.asarray(got), np.asarray(want),
                                   rtol=2e-5, atol=2e-5)

    print("KERNEL_OK")
</pallas_src>

<mosaic_0001>
module attributes {stable_mosaic.version = 11 : i64} {
  func.func @dnnvae_kernel(%arg0: i32, %arg1: memref<8x121xf32, #tpu.memory_space<vmem>>, %arg2: memref<8x16xf32, #tpu.memory_space<vmem>>, %arg3: memref<121x128xf32, #tpu.memory_space<vmem>>, %arg4: memref<1x128xf32, #tpu.memory_space<vmem>>, %arg5: memref<128x128xf32, #tpu.memory_space<vmem>>, %arg6: memref<1x128xf32, #tpu.memory_space<vmem>>, %arg7: memref<128x64xf32, #tpu.memory_space<vmem>>, %arg8: memref<1x64xf32, #tpu.memory_space<vmem>>, %arg9: memref<64x16xf32, #tpu.memory_space<vmem>>, %arg10: memref<1x16xf32, #tpu.memory_space<vmem>>, %arg11: memref<64x16xf32, #tpu.memory_space<vmem>>, %arg12: memref<1x16xf32, #tpu.memory_space<vmem>>, %arg13: memref<16x64xf32, #tpu.memory_space<vmem>>, %arg14: memref<1x64xf32, #tpu.memory_space<vmem>>, %arg15: memref<64x128xf32, #tpu.memory_space<vmem>>, %arg16: memref<1x128xf32, #tpu.memory_space<vmem>>, %arg17: memref<128x121xf32, #tpu.memory_space<vmem>>, %arg18: memref<1x121xf32, #tpu.memory_space<vmem>>, %arg19: memref<8x16xf32, #tpu.memory_space<vmem>>, %arg20: memref<8x16xf32, #tpu.memory_space<vmem>>, %arg21: memref<8x16xf32, #tpu.memory_space<vmem>>, %arg22: memref<8x121xf32, #tpu.memory_space<vmem>>) attributes {dimension_semantics = [#tpu.dimension_semantics<parallel>], iteration_bounds = array<i64: 2>, scalar_prefetch = 0 : i64, scratch_operands = 0 : i64, tpu.core_type = #tpu.core_type<tc>, window_params = [{transform_indices = @transform_0, window_bounds = array<i64: 8, 121>}, {transform_indices = @transform_1, window_bounds = array<i64: 8, 16>}, {pipeline_mode = #tpu.pipeline_mode<synchronous>, transform_indices = @transform_2, window_bounds = array<i64: 121, 128>}, {pipeline_mode = #tpu.pipeline_mode<synchronous>, transform_indices = @transform_3, window_bounds = array<i64: 1, 128>}, {pipeline_mode = #tpu.pipeline_mode<synchronous>, transform_indices = @transform_4, window_bounds = array<i64: 128, 128>}, {pipeline_mode = #tpu.pipeline_mode<synchronous>, transform_indices = @transform_5, window_bounds = array<i64: 1, 128>}, {pipeline_mode = #tpu.pipeline_mode<synchronous>, transform_indices = @transform_6, window_bounds = array<i64: 128, 64>}, {pipeline_mode = #tpu.pipeline_mode<synchronous>, transform_indices = @transform_7, window_bounds = array<i64: 1, 64>}, {pipeline_mode = #tpu.pipeline_mode<synchronous>, transform_indices = @transform_8, window_bounds = array<i64: 64, 16>}, {pipeline_mode = #tpu.pipeline_mode<synchronous>, transform_indices = @transform_9, window_bounds = array<i64: 1, 16>}, {pipeline_mode = #tpu.pipeline_mode<synchronous>, transform_indices = @transform_10, window_bounds = array<i64: 64, 16>}, {pipeline_mode = #tpu.pipeline_mode<synchronous>, transform_indices = @transform_11, window_bounds = array<i64: 1, 16>}, {pipeline_mode = #tpu.pipeline_mode<synchronous>, transform_indices = @transform_12, window_bounds = array<i64: 16, 64>}, {pipeline_mode = #tpu.pipeline_mode<synchronous>, transform_indices = @transform_13, window_bounds = array<i64: 1, 64>}, {pipeline_mode = #tpu.pipeline_mode<synchronous>, transform_indices = @transform_14, window_bounds = array<i64: 64, 128>}, {pipeline_mode = #tpu.pipeline_mode<synchronous>, transform_indices = @transform_15, window_bounds = array<i64: 1, 128>}, {pipeline_mode = #tpu.pipeline_mode<synchronous>, transform_indices = @transform_16, window_bounds = array<i64: 128, 121>}, {pipeline_mode = #tpu.pipeline_mode<synchronous>, transform_indices = @transform_17, window_bounds = array<i64: 1, 121>}, {transform_indices = @transform_18, window_bounds = array<i64: 8, 16>}, {transform_indices = @transform_19, window_bounds = array<i64: 8, 16>}, {transform_indices = @transform_20, window_bounds = array<i64: 8, 16>}, {transform_indices = @transform_21, window_bounds = array<i64: 8, 121>}]} {
    %c0 = arith.constant 0 : index
    %c0_0 = arith.constant 0 : index
    %0 = vector.load %arg1[%c0, %c0_0] : memref<8x121xf32, #tpu.memory_space<vmem>>, vector<8x121xf32>
    %c0_1 = arith.constant 0 : index
    %c0_2 = arith.constant 0 : index
    %1 = vector.load %arg3[%c0_1, %c0_2] : memref<121x128xf32, #tpu.memory_space<vmem>>, vector<121x128xf32>
    %cst = arith.constant dense<0.000000e+00> : vector<8x128xf32>
    %2 = tpu.matmul %0, %1, %cst {dimension_numbers = #tpu.dot_dimension_numbers<[1], [0], [0], [1], [0, 0, 1, 1], [], []>} : vector<8x121xf32>, vector<121x128xf32>, vector<8x128xf32> -> vector<8x128xf32>
    %c0_3 = arith.constant 0 : index
    %c0_4 = arith.constant 0 : index
    %3 = vector.load %arg4[%c0_3, %c0_4] : memref<1x128xf32, #tpu.memory_space<vmem>>, vector<1x128xf32>
    %4 = vector.broadcast %3 : vector<1x128xf32> to vector<8x128xf32>
    %5 = arith.addf %2, %4 : vector<8x128xf32>
    %cst_5 = arith.constant 1.000000e-01 : f32
    %6 = vector.broadcast %cst_5 : f32 to vector<8x128xf32>
    %7 = arith.mulf %6, %5 : vector<8x128xf32>
    %8 = arith.maximumf %5, %7 : vector<8x128xf32>
    %c0_6 = arith.constant 0 : index
    %c0_7 = arith.constant 0 : index
    %9 = vector.load %arg5[%c0_6, %c0_7] : memref<128x128xf32, #tpu.memory_space<vmem>>, vector<128x128xf32>
    %cst_8 = arith.constant dense<0.000000e+00> : vector<8x128xf32>
    %10 = tpu.matmul %8, %9, %cst_8 {dimension_numbers = #tpu.dot_dimension_numbers<[1], [0], [0], [1], [0, 0, 1, 1], [], []>} : vector<8x128xf32>, vector<128x128xf32>, vector<8x128xf32> -> vector<8x128xf32>
    %c0_9 = arith.constant 0 : index
    %c0_10 = arith.constant 0 : index
    %11 = vector.load %arg6[%c0_9, %c0_10] : memref<1x128xf32, #tpu.memory_space<vmem>>, vector<1x128xf32>
    %12 = vector.broadcast %11 : vector<1x128xf32> to vector<8x128xf32>
    %13 = arith.addf %10, %12 : vector<8x128xf32>
    %cst_11 = arith.constant 1.000000e-01 : f32
    %14 = vector.broadcast %cst_11 : f32 to vector<8x128xf32>
    %15 = arith.mulf %14, %13 : vector<8x128xf32>
    %16 = arith.maximumf %13, %15 : vector<8x128xf32>
    %c0_12 = arith.constant 0 : index
    %c0_13 = arith.constant 0 : index
    %17 = vector.load %arg7[%c0_12, %c0_13] : memref<128x64xf32, #tpu.memory_space<vmem>>, vector<128x64xf32>
    %cst_14 = arith.constant dense<0.000000e+00> : vector<8x64xf32>
    %18 = tpu.matmul %16, %17, %cst_14 {dimension_numbers = #tpu.dot_dimension_numbers<[1], [0], [0], [1], [0, 0, 1, 1], [], []>} : vector<8x128xf32>, vector<128x64xf32>, vector<8x64xf32> -> vector<8x64xf32>
    %c0_15 = arith.constant 0 : index
    %c0_16 = arith.constant 0 : index
    %19 = vector.load %arg8[%c0_15, %c0_16] : memref<1x64xf32, #tpu.memory_space<vmem>>, vector<1x64xf32>
    %20 = vector.broadcast %19 : vector<1x64xf32> to vector<8x64xf32>
    %21 = arith.addf %18, %20 : vector<8x64xf32>
    %cst_17 = arith.constant 1.000000e-01 : f32
    %22 = vector.broadcast %cst_17 : f32 to vector<8x64xf32>
    %23 = arith.mulf %22, %21 : vector<8x64xf32>
    %24 = arith.maximumf %21, %23 : vector<8x64xf32>
    %c0_18 = arith.constant 0 : index
    %c0_19 = arith.constant 0 : index
    %25 = vector.load %arg9[%c0_18, %c0_19] : memref<64x16xf32, #tpu.memory_space<vmem>>, vector<64x16xf32>
    %cst_20 = arith.constant dense<0.000000e+00> : vector<8x16xf32>
    %26 = tpu.matmul %24, %25, %cst_20 {dimension_numbers = #tpu.dot_dimension_numbers<[1], [0], [0], [1], [0, 0, 1, 1], [], []>} : vector<8x64xf32>, vector<64x16xf32>, vector<8x16xf32> -> vector<8x16xf32>
    %c0_21 = arith.constant 0 : index
    %c0_22 = arith.constant 0 : index
    %27 = vector.load %arg10[%c0_21, %c0_22] : memref<1x16xf32, #tpu.memory_space<vmem>>, vector<1x16xf32>
    %28 = vector.broadcast %27 : vector<1x16xf32> to vector<8x16xf32>
    %29 = arith.addf %26, %28 : vector<8x16xf32>
    %c0_23 = arith.constant 0 : index
    %c0_24 = arith.constant 0 : index
    %30 = vector.load %arg11[%c0_23, %c0_24] : memref<64x16xf32, #tpu.memory_space<vmem>>, vector<64x16xf32>
    %cst_25 = arith.constant dense<0.000000e+00> : vector<8x16xf32>
    %31 = tpu.matmul %24, %30, %cst_25 {dimension_numbers = #tpu.dot_dimension_numbers<[1], [0], [0], [1], [0, 0, 1, 1], [], []>} : vector<8x64xf32>, vector<64x16xf32>, vector<8x16xf32> -> vector<8x16xf32>
    %c0_26 = arith.constant 0 : index
    %c0_27 = arith.constant 0 : index
    %32 = vector.load %arg12[%c0_26, %c0_27] : memref<1x16xf32, #tpu.memory_space<vmem>>, vector<1x16xf32>
    %33 = vector.broadcast %32 : vector<1x16xf32> to vector<8x16xf32>
    %34 = arith.addf %31, %33 : vector<8x16xf32>
    %c0_28 = arith.constant 0 : index
    %c0_29 = arith.constant 0 : index
    %35 = vector.load %arg2[%c0_28, %c0_29] : memref<8x16xf32, #tpu.memory_space<vmem>>, vector<8x16xf32>
    %cst_30 = arith.constant 5.000000e-01 : f32
    %36 = vector.broadcast %cst_30 : f32 to vector<8x16xf32>
    %37 = arith.mulf %34, %36 : vector<8x16xf32>
    %38 = math.exp %37 : vector<8x16xf32>
    %39 = arith.mulf %35, %38 : vector<8x16xf32>
    %40 = arith.addf %29, %39 : vector<8x16xf32>
    %c0_31 = arith.constant 0 : index
    %c0_32 = arith.constant 0 : index
    %41 = vector.load %arg13[%c0_31, %c0_32] : memref<16x64xf32, #tpu.memory_space<vmem>>, vector<16x64xf32>
    %cst_33 = arith.constant dense<0.000000e+00> : vector<8x64xf32>
    %42 = tpu.matmul %40, %41, %cst_33 {dimension_numbers = #tpu.dot_dimension_numbers<[1], [0], [0], [1], [0, 0, 1, 1], [], []>} : vector<8x16xf32>, vector<16x64xf32>, vector<8x64xf32> -> vector<8x64xf32>
    %c0_34 = arith.constant 0 : index
    %c0_35 = arith.constant 0 : index
    %43 = vector.load %arg14[%c0_34, %c0_35] : memref<1x64xf32, #tpu.memory_space<vmem>>, vector<1x64xf32>
    %44 = vector.broadcast %43 : vector<1x64xf32> to vector<8x64xf32>
    %45 = arith.addf %42, %44 : vector<8x64xf32>
    %cst_36 = arith.constant 1.000000e-01 : f32
    %46 = vector.broadcast %cst_36 : f32 to vector<8x64xf32>
    %47 = arith.mulf %46, %45 : vector<8x64xf32>
    %48 = arith.maximumf %45, %47 : vector<8x64xf32>
    %c0_37 = arith.constant 0 : index
    %c0_38 = arith.constant 0 : index
    %49 = vector.load %arg15[%c0_37, %c0_38] : memref<64x128xf32, #tpu.memory_space<vmem>>, vector<64x128xf32>
    %cst_39 = arith.constant dense<0.000000e+00> : vector<8x128xf32>
    %50 = tpu.matmul %48, %49, %cst_39 {dimension_numbers = #tpu.dot_dimension_numbers<[1], [0], [0], [1], [0, 0, 1, 1], [], []>} : vector<8x64xf32>, vector<64x128xf32>, vector<8x128xf32> -> vector<8x128xf32>
    %c0_40 = arith.constant 0 : index
    %c0_41 = arith.constant 0 : index
    %51 = vector.load %arg16[%c0_40, %c0_41] : memref<1x128xf32, #tpu.memory_space<vmem>>, vector<1x128xf32>
    %52 = vector.broadcast %51 : vector<1x128xf32> to vector<8x128xf32>
    %53 = arith.addf %50, %52 : vector<8x128xf32>
    %cst_42 = arith.constant 1.000000e-01 : f32
    %54 = vector.broadcast %cst_42 : f32 to vector<8x128xf32>
    %55 = arith.mulf %54, %53 : vector<8x128xf32>
    %56 = arith.maximumf %53, %55 : vector<8x128xf32>
    %c0_43 = arith.constant 0 : index
    %c0_44 = arith.constant 0 : index
    %57 = vector.load %arg17[%c0_43, %c0_44] : memref<128x121xf32, #tpu.memory_space<vmem>>, vector<128x121xf32>
    %cst_45 = arith.constant dense<0.000000e+00> : vector<8x121xf32>
    %58 = tpu.matmul %56, %57, %cst_45 {dimension_numbers = #tpu.dot_dimension_numbers<[1], [0], [0], [1], [0, 0, 1, 1], [], []>} : vector<8x128xf32>, vector<128x121xf32>, vector<8x121xf32> -> vector<8x121xf32>
    %c0_46 = arith.constant 0 : index
    %c0_47 = arith.constant 0 : index
    %59 = vector.load %arg18[%c0_46, %c0_47] : memref<1x121xf32, #tpu.memory_space<vmem>>, vector<1x121xf32>
    %60 = vector.broadcast %59 : vector<1x121xf32> to vector<8x121xf32>
    %61 = arith.addf %58, %60 : vector<8x121xf32>
    %62 = arith.negf %61 : vector<8x121xf32>
    %63 = math.exp %62 : vector<8x121xf32>
    %cst_48 = arith.constant 1.000000e+00 : f32
    %64 = vector.broadcast %cst_48 : f32 to vector<8x121xf32>
    %65 = arith.addf %64, %63 : vector<8x121xf32>
    %66 = arith.divf %64, %65 : vector<8x121xf32>
    %c0_49 = arith.constant 0 : index
    %c0_50 = arith.constant 0 : index
    %67 = vector.load %arg19[%c0_49, %c0_50] : memref<8x16xf32, #tpu.memory_space<vmem>>, vector<8x16xf32>
    tpu.vector_store %arg19[%c0_49, %c0_50], %40 {strides = array<i32>} : memref<8x16xf32, #tpu.memory_space<vmem>>, vector<8x16xf32>,
    %c0_51 = arith.constant 0 : index
    %c0_52 = arith.constant 0 : index
    %68 = vector.load %arg20[%c0_51, %c0_52] : memref<8x16xf32, #tpu.memory_space<vmem>>, vector<8x16xf32>
    tpu.vector_store %arg20[%c0_51, %c0_52], %29 {strides = array<i32>} : memref<8x16xf32, #tpu.memory_space<vmem>>, vector<8x16xf32>,
    %c0_53 = arith.constant 0 : index
    %c0_54 = arith.constant 0 : index
    %69 = vector.load %arg21[%c0_53, %c0_54] : memref<8x16xf32, #tpu.memory_space<vmem>>, vector<8x16xf32>
    tpu.vector_store %arg21[%c0_53, %c0_54], %34 {strides = array<i32>} : memref<8x16xf32, #tpu.memory_space<vmem>>, vector<8x16xf32>,
    %c0_55 = arith.constant 0 : index
    %c0_56 = arith.constant 0 : index
    %70 = vector.load %arg22[%c0_55, %c0_56] : memref<8x121xf32, #tpu.memory_space<vmem>>, vector<8x121xf32>
    tpu.vector_store %arg22[%c0_55, %c0_56], %66 {strides = array<i32>} : memref<8x121xf32, #tpu.memory_space<vmem>>, vector<8x121xf32>,
    return
  }
  func.func @transform_0(%arg0: i32) -> (i32, i32) {
    %c0_i32 = arith.constant 0 : i32
    %c0_i32_0 = arith.constant 0 : i32
    return %arg0, %c0_i32 : i32, i32
  }
  func.func @transform_1(%arg0: i32) -> (i32, i32) {
    %c0_i32 = arith.constant 0 : i32
    %c0_i32_0 = arith.constant 0 : i32
    return %arg0, %c0_i32 : i32, i32
  }
  func.func @transform_2(%arg0: i32) -> (i32, i32) {
    %c0_i32 = arith.constant 0 : i32
    %c0_i32_0 = arith.constant 0 : i32
    %c0_i32_1 = arith.constant 0 : i32
    return %c0_i32, %c0_i32_0 : i32, i32
  }
  func.func @transform_3(%arg0: i32) -> (i32, i32) {
    %c0_i32 = arith.constant 0 : i32
    %c0_i32_0 = arith.constant 0 : i32
    %c0_i32_1 = arith.constant 0 : i32
    return %c0_i32, %c0_i32_0 : i32, i32
  }
  func.func @transform_4(%arg0: i32) -> (i32, i32) {
    %c0_i32 = arith.constant 0 : i32
    %c0_i32_0 = arith.constant 0 : i32
    %c0_i32_1 = arith.constant 0 : i32
    return %c0_i32, %c0_i32_0 : i32, i32
  }
  func.func @transform_5(%arg0: i32) -> (i32, i32) {
    %c0_i32 = arith.constant 0 : i32
    %c0_i32_0 = arith.constant 0 : i32
    %c0_i32_1 = arith.constant 0 : i32
    return %c0_i32, %c0_i32_0 : i32, i32
  }
  func.func @transform_6(%arg0: i32) -> (i32, i32) {
    %c0_i32 = arith.constant 0 : i32
    %c0_i32_0 = arith.constant 0 : i32
    %c0_i32_1 = arith.constant 0 : i32
    return %c0_i32, %c0_i32_0 : i32, i32
  }
  func.func @transform_7(%arg0: i32) -> (i32, i32) {
    %c0_i32 = arith.constant 0 : i32
    %c0_i32_0 = arith.constant 0 : i32
    %c0_i32_1 = arith.constant 0 : i32
    return %c0_i32, %c0_i32_0 : i32, i32
  }
  func.func @transform_8(%arg0: i32) -> (i32, i32) {
    %c0_i32 = arith.constant 0 : i32
    %c0_i32_0 = arith.constant 0 : i32
    %c0_i32_1 = arith.constant 0 : i32
    return %c0_i32, %c0_i32_0 : i32, i32
  }
  func.func @transform_9(%arg0: i32) -> (i32, i32) {
    %c0_i32 = arith.constant 0 : i32
    %c0_i32_0 = arith.constant 0 : i32
    %c0_i32_1 = arith.constant 0 : i32
    return %c0_i32, %c0_i32_0 : i32, i32
  }
  func.func @transform_10(%arg0: i32) -> (i32, i32) {
    %c0_i32 = arith.constant 0 : i32
    %c0_i32_0 = arith.constant 0 : i32
    %c0_i32_1 = arith.constant 0 : i32
    return %c0_i32, %c0_i32_0 : i32, i32
  }
  func.func @transform_11(%arg0: i32) -> (i32, i32) {
    %c0_i32 = arith.constant 0 : i32
    %c0_i32_0 = arith.constant 0 : i32
    %c0_i32_1 = arith.constant 0 : i32
    return %c0_i32, %c0_i32_0 : i32, i32
  }
  func.func @transform_12(%arg0: i32) -> (i32, i32) {
    %c0_i32 = arith.constant 0 : i32
    %c0_i32_0 = arith.constant 0 : i32
    %c0_i32_1 = arith.constant 0 : i32
    return %c0_i32, %c0_i32_0 : i32, i32
  }
  func.func @transform_13(%arg0: i32) -> (i32, i32) {
    %c0_i32 = arith.constant 0 : i32
    %c0_i32_0 = arith.constant 0 : i32
    %c0_i32_1 = arith.constant 0 : i32
    return %c0_i32, %c0_i32_0 : i32, i32
  }
  func.func @transform_14(%arg0: i32) -> (i32, i32) {
    %c0_i32 = arith.constant 0 : i32
    %c0_i32_0 = arith.constant 0 : i32
    %c0_i32_1 = arith.constant 0 : i32
    return %c0_i32, %c0_i32_0 : i32, i32
  }
  func.func @transform_15(%arg0: i32) -> (i32, i32) {
    %c0_i32 = arith.constant 0 : i32
    %c0_i32_0 = arith.constant 0 : i32
    %c0_i32_1 = arith.constant 0 : i32
    return %c0_i32, %c0_i32_0 : i32, i32
  }
  func.func @transform_16(%arg0: i32) -> (i32, i32) {
    %c0_i32 = arith.constant 0 : i32
    %c0_i32_0 = arith.constant 0 : i32
    %c0_i32_1 = arith.constant 0 : i32
    return %c0_i32, %c0_i32_0 : i32, i32
  }
  func.func @transform_17(%arg0: i32) -> (i32, i32) {
    %c0_i32 = arith.constant 0 : i32
    %c0_i32_0 = arith.constant 0 : i32
    %c0_i32_1 = arith.constant 0 : i32
    return %c0_i32, %c0_i32_0 : i32, i32
  }
  func.func @transform_18(%arg0: i32) -> (i32, i32) {
    %c0_i32 = arith.constant 0 : i32
    %c0_i32_0 = arith.constant 0 : i32
    return %arg0, %c0_i32 : i32, i32
  }
  func.func @transform_19(%arg0: i32) -> (i32, i32) {
    %c0_i32 = arith.constant 0 : i32
    %c0_i32_0 = arith.constant 0 : i32
    return %arg0, %c0_i32 : i32, i32
  }
  func.func @transform_20(%arg0: i32) -> (i32, i32) {
    %c0_i32 = arith.constant 0 : i32
    %c0_i32_0 = arith.constant 0 : i32
    return %arg0, %c0_i32 : i32, i32
  }
  func.func @transform_21(%arg0: i32) -> (i32, i32) {
    %c0_i32 = arith.constant 0 : i32
    %c0_i32_0 = arith.constant 0 : i32
    return %arg0, %c0_i32 : i32, i32
  }
}

</mosaic_0001>

<llo_original>
// kernel: tpu_custom_call.1
$region0: #{tpu_custom_call.1}
  #allocation0 [shape = 'u32[]', space=smem, size = 0x4, offset = 0x4, fixed_abs, tag = 'smem constant byte address 0x4 - core index']
  #allocation1 [shape = 'u32[72,128]{1,0:T(1,128)}', space=vmem, size = 0x9000, scoped, tag = 'internal scratch']
  %s0 = inlined_call_operand.vmem [shape: f32[16,121], index: 0, kind: input, shape index: {}]
  %s1 = inlined_call_operand.hbm [shape: f32[16,16], index: 1, kind: input, shape index: {}]
  %s2 = inlined_call_operand.vmem [shape: f32[121,128], index: 2, kind: input, shape index: {}]
  %s3 = inlined_call_operand.hbm [shape: f32[1,128], index: 3, kind: input, shape index: {}]
  %s4 = inlined_call_operand.vmem [shape: f32[128,128], index: 4, kind: input, shape index: {}]
  %s5 = inlined_call_operand.vmem [shape: f32[1,128], index: 5, kind: input, shape index: {}]
  %s6 = inlined_call_operand.vmem [shape: f32[128,64], index: 6, kind: input, shape index: {}]
  %s7 = inlined_call_operand.vmem [shape: f32[1,64], index: 7, kind: input, shape index: {}]
  %s8 = inlined_call_operand.vmem [shape: f32[64,16], index: 8, kind: input, shape index: {}]
  %s9 = inlined_call_operand.vmem [shape: f32[1,16], index: 9, kind: input, shape index: {}]
  %s10 = inlined_call_operand.vmem [shape: f32[64,16], index: 10, kind: input, shape index: {}]
  %s11 = inlined_call_operand.vmem [shape: f32[1,16], index: 11, kind: input, shape index: {}]
  %s12 = inlined_call_operand.hbm [shape: f32[16,64], index: 12, kind: input, shape index: {}]
  %s13 = inlined_call_operand.vmem [shape: f32[1,64], index: 13, kind: input, shape index: {}]
  %s14 = inlined_call_operand.hbm [shape: f32[64,128], index: 14, kind: input, shape index: {}]
  %s15 = inlined_call_operand.vmem [shape: f32[1,128], index: 15, kind: input, shape index: {}]
  %s16 = inlined_call_operand.hbm [shape: f32[128,121], index: 16, kind: input, shape index: {}]
  %s17 = inlined_call_operand.vmem [shape: f32[1,121], index: 17, kind: input, shape index: {}]
  %s18 = inlined_call_operand.hbm [shape: f32[16,16], index: 18, kind: output, shape index: {0}]
  %s19 = inlined_call_operand.hbm [shape: f32[16,16], index: 19, kind: output, shape index: {1}]
  %s20 = inlined_call_operand.hbm [shape: f32[16,16], index: 20, kind: output, shape index: {2}]
  %s21 = inlined_call_operand.hbm [shape: f32[16,121], index: 21, kind: output, shape index: {3}]
  %22 = xla_tuple %s18, %s19, %s20, %s21
  %s23 = sld [smem:[#allocation0]]
  $region149: #{tpu_custom_call.1} parent=0
    _
  %s25 = ssub.s32 1, %s23
  %s26 = scalar_select 0, %s25, %s23
  $region1: #{tpu_custom_call.1} parent=0
    #allocation2 [shape = 'u8[8192]{0}', space=vmem, size = 0x2000, scoped, tag = 'input window, operand 1']
    #allocation3 [shape = 's32[2]{0}', space=sflag, size = 0x8, scoped, tag = 'scoped memory for tpu_custom_call.1']
    #allocation4 [shape = 's32[2]{0}', space=sflag, size = 0x8, scoped, tag = 'scoped memory for tpu_custom_call.1']
    #allocation5 [shape = 'u8[512]{0}', space=vmem, size = 0x400, scoped, tag = 'input window, operand 3, single buffered']
    #allocation6 [shape = 's32[1]{0}', space=sflag, size = 0x4, scoped, tag = 'scoped memory for tpu_custom_call.1']
    #allocation7 [shape = 'u8[8192]{0}', space=vmem, size = 0x2000, scoped, tag = 'input window, operand 12, single buffered']
    #allocation8 [shape = 'u8[32768]{0}', space=vmem, size = 0x8000, scoped, tag = 'input window, operand 14, single buffered']
    #allocation9 [shape = 's32[1]{0}', space=sflag, size = 0x4, scoped, tag = 'scoped memory for tpu_custom_call.1']
    #allocation10 [shape = 'u8[65536]{0}', space=vmem, size = 0x10000, scoped, tag = 'input window, operand 16, single buffered']
    #allocation11 [shape = 'u8[8192]{0}', space=vmem, size = 0x2000, scoped, tag = 'output window, operand 0']
    #allocation12 [shape = 'u8[8192]{0}', space=vmem, size = 0x2000, scoped, tag = 'output window, operand 1']
    #allocation13 [shape = 's32[2]{0}', space=sflag, size = 0x8, scoped, tag = 'scoped memory for tpu_custom_call.1']
    #allocation14 [shape = 'u8[8192]{0}', space=vmem, size = 0x2000, scoped, tag = 'output window, operand 2']
    #allocation15 [shape = 'u8[8192]{0}', space=vmem, size = 0x2000, scoped, tag = 'output window, operand 3']
    #allocation16 [shape = 's32[2]{0}', space=sflag, size = 0x8, scoped, tag = 'scoped memory for tpu_custom_call.1']
    %27 = vsyncpa [#allocation3], 0
    %s28 = scalar_lea.sflag [#allocation3], 1
    %29 = vsyncpa %s28, 0
    %30 = vsyncpa [#allocation6], 0
    %31 = vsyncpa [#allocation9], 0
    %32 = vsyncpa [#allocation4], 0
    %s33 = scalar_lea.sflag [#allocation4], 1
    %34 = vsyncpa %s33, 0
    %35 = vsyncpa [#allocation13], 0
    %s36 = scalar_lea.sflag [#allocation13], 1
    %37 = vsyncpa %s36, 0
    %38 = vsyncpa [#allocation16], 0
    %s39 = scalar_lea.sflag [#allocation16], 1
    %40 = vsyncpa %s39, 0
    loop: start=0, step=1, limit=4
    $region2: #{tpu_custom_call.1} parent=1 // loop_pre_header
      _
    $region3: #{tpu_custom_call.1} parent=1 // loop_header
      %s42 = sphi 0, %s46
      %p43 = scmp.ge.s32.totalorder %s42, 4
      %s52 = sphi 0, %s54
      %s55 = sphi 0, %s52
      %s56 = sphi 0, %s55
      %s72 = sphi 0, %s56
      %s78 = sphi 0, %s80
      %s81 = sphi 0, %s78
      %s82 = sphi 0, %s81
      %s98 = sphi 0, %s82
      %s102 = sphi 0, %s102
      %s104 = sphi 0, %s102
      %s105 = sphi 0, %s104
      %s119 = sphi 0, %s105
      %s123 = sphi 0, %s123
      %s125 = sphi 0, %s123
      %s126 = sphi 0, %s125
      %s140 = sphi 0, %s126
      %s144 = sphi 0, %s144
      %s146 = sphi 0, %s144
      %s147 = sphi 0, %s146
      %s161 = sphi 0, %s147
      %s165 = sphi 0, %s165
      %s167 = sphi 0, %s165
      %s168 = sphi 0, %s167
      %s182 = sphi 0, %s168
      %s186 = sphi 0, %s186
      %s188 = sphi 0, %s186
      %s189 = sphi 0, %s188
      %s203 = sphi 0, %s189
      %s207 = sphi 0, %s207
      %s209 = sphi 0, %s207
      %s210 = sphi 0, %s209
      %s224 = sphi 0, %s210
      %s228 = sphi 0, %s228
      %s230 = sphi 0, %s228
      %s231 = sphi 0, %s230
      %s245 = sphi 0, %s231
      %s249 = sphi 0, %s249
      %s251 = sphi 0, %s249
      %s252 = sphi 0, %s251
      %s266 = sphi 0, %s252
      %s270 = sphi 0, %s270
      %s272 = sphi 0, %s270
      %s273 = sphi 0, %s272
      %s287 = sphi 0, %s273
      %s291 = sphi 0, %s291
      %s293 = sphi 0, %s291
      %s294 = sphi 0, %s293
      %s308 = sphi 0, %s294
      %s312 = sphi 0, %s312
      %s314 = sphi 0, %s312
      %s315 = sphi 0, %s314
      %s329 = sphi 0, %s315
      %s333 = sphi 0, %s333
      %s335 = sphi 0, %s333
      %s336 = sphi 0, %s335
      %s350 = sphi 0, %s336
      %s354 = sphi 0, %s354
      %s356 = sphi 0, %s354
      %s357 = sphi 0, %s356
      %s371 = sphi 0, %s357
      %s375 = sphi 0, %s375
      %s377 = sphi 0, %s375
      %s378 = sphi 0, %s377
      %s392 = sphi 0, %s378
      %s396 = sphi 0, %s396
      %s398 = sphi 0, %s396
      %s399 = sphi 0, %s398
      %s413 = sphi 0, %s399
      %s417 = sphi 0, %s417
      %s419 = sphi 0, %s417
      %s420 = sphi 0, %s419
      %s434 = sphi 0, %s420
      %s440 = sphi 0, %s442
      %s443 = sphi 0, %s440
      %s444 = sphi 0, %s443
      %s460 = sphi 0, %s444
      %s466 = sphi 0, %s468
      %s469 = sphi 0, %s466
      %s470 = sphi 0, %s469
      %s486 = sphi 0, %s470
      %s492 = sphi 0, %s494
      %s495 = sphi 0, %s492
      %s496 = sphi 0, %s495
      %s512 = sphi 0, %s496
      %s518 = sphi 0, %s520
      %s521 = sphi 0, %s518
      %s522 = sphi 0, %s521
      %s538 = sphi 0, %s522
    $region4: #{tpu_custom_call.1} parent=1 // loop_header_branch
      %45 = sbr.rel (%p43) target = $region8
    $region5: #{tpu_custom_call.1} parent=1 // loop_body
      %s47 = ssub.s32 %s42, 1
      %s48 = ssub.s32 %s42, 2
      %s49 = sadd.s32 %s42, 1
      %s50 = ssub.s32 %s42, %s49
      %p51 = scmp.eq.s32.totalorder %s50, 0
      %s53 = sadd.s32 %s52, 1
      %s54 = scalar_select %p51, %s52, %s53
      %p57 = pneg %p51
      %p58 = scmp.eq.s32.totalorder %s42, 1
      %p59 = por %p57, %p58
      %p60 = scmp.ne.s32.totalorder %s52, %s55
      %p61 = scmp.eq.s32.totalorder %s42, 0
      %p62 = por %p60, %p61
      %p63 = scmp.ne.s32.totalorder %s52, %s55
      %p64 = scmp.eq.s32.totalorder %s47, 1
      %p65 = por %p63, %p64
      %p66 = scmp.ne.s32.totalorder %s55, %s56
      %p67 = scmp.eq.s32.totalorder %s47, 0
      %p68 = por %p66, %p67
      %p69 = scmp.ne.s32.totalorder %s55, %s56
      %p70 = scmp.eq.s32.totalorder %s48, 1
      %p71 = por %p69, %p70
      %p73 = scmp.ne.s32.totalorder %s56, %s72
      %p74 = scmp.eq.s32.totalorder %s48, 0
      %p75 = por %p73, %p74
      %s76 = ssub.s32 %s42, %s49
      %p77 = scmp.eq.s32.totalorder %s76, 0
      %s79 = sadd.s32 %s78, 1
      %s80 = scalar_select %p77, %s78, %s79
      %p83 = pneg %p77
      %p84 = scmp.eq.s32.totalorder %s42, 1
      %p85 = por %p83, %p84
      %p86 = scmp.ne.s32.totalorder %s78, %s81
      %p87 = scmp.eq.s32.totalorder %s42, 0
      %p88 = por %p86, %p87
      %p89 = scmp.ne.s32.totalorder %s78, %s81
      %p90 = scmp.eq.s32.totalorder %s47, 1
      %p91 = por %p89, %p90
      %p92 = scmp.ne.s32.totalorder %s81, %s82
      %p93 = scmp.eq.s32.totalorder %s47, 0
      %p94 = por %p92, %p93
      %p95 = scmp.ne.s32.totalorder %s81, %s82
      %p96 = scmp.eq.s32.totalorder %s48, 1
      %p97 = por %p95, %p96
      %p99 = scmp.ne.s32.totalorder %s82, %s98
      %p100 = scmp.eq.s32.totalorder %s48, 0
      %p101 = por %p99, %p100
      %s103 = sadd.s32 %s102, 1
      %p106 = scmp.eq.s32.totalorder %s42, 1
      %p107 = scmp.ne.s32.totalorder %s102, %s104
      %p108 = scmp.eq.s32.totalorder %s42, 0
      %p109 = por %p107, %p108
      %p110 = scmp.ne.s32.totalorder %s102, %s104
      %p111 = scmp.eq.s32.totalorder %s47, 1
      %p112 = por %p110, %p111
      %p113 = scmp.ne.s32.totalorder %s104, %s105
      %p114 = scmp.eq.s32.totalorder %s47, 0
      %p115 = por %p113, %p114
      %p116 = scmp.ne.s32.totalorder %s104, %s105
      %p117 = scmp.eq.s32.totalorder %s48, 1
      %p118 = por %p116, %p117
      %p120 = scmp.ne.s32.totalorder %s105, %s119
      %p121 = scmp.eq.s32.totalorder %s48, 0
      %p122 = por %p120, %p121
      %s124 = sadd.s32 %s123, 1
      %p127 = scmp.eq.s32.totalorder %s42, 1
      %p128 = scmp.ne.s32.totalorder %s123, %s125
      %p129 = scmp.eq.s32.totalorder %s42, 0
      %p130 = por %p128, %p129
      %p131 = scmp.ne.s32.totalorder %s123, %s125
      %p132 = scmp.eq.s32.totalorder %s47, 1
      %p133 = por %p131, %p132
      %p134 = scmp.ne.s32.totalorder %s125, %s126
      %p135 = scmp.eq.s32.totalorder %s47, 0
      %p136 = por %p134, %p135
      %p137 = scmp.ne.s32.totalorder %s125, %s126
      %p138 = scmp.eq.s32.totalorder %s48, 1
      %p139 = por %p137, %p138
      %p141 = scmp.ne.s32.totalorder %s126, %s140
      %p142 = scmp.eq.s32.totalorder %s48, 0
      %p143 = por %p141, %p142
      %s145 = sadd.s32 %s144, 1
      %p148 = scmp.eq.s32.totalorder %s42, 1
      %p149 = scmp.ne.s32.totalorder %s144, %s146
      %p150 = scmp.eq.s32.totalorder %s42, 0
      %p151 = por %p149, %p150
      %p152 = scmp.ne.s32.totalorder %s144, %s146
      %p153 = scmp.eq.s32.totalorder %s47, 1
      %p154 = por %p152, %p153
      %p155 = scmp.ne.s32.totalorder %s146, %s147
      %p156 = scmp.eq.s32.totalorder %s47, 0
      %p157 = por %p155, %p156
      %p158 = scmp.ne.s32.totalorder %s146, %s147
      %p159 = scmp.eq.s32.totalorder %s48, 1
      %p160 = por %p158, %p159
      %p162 = scmp.ne.s32.totalorder %s147, %s161
      %p163 = scmp.eq.s32.totalorder %s48, 0
      %p164 = por %p162, %p163
      %s166 = sadd.s32 %s165, 1
      %p169 = scmp.eq.s32.totalorder %s42, 1
      %p170 = scmp.ne.s32.totalorder %s165, %s167
      %p171 = scmp.eq.s32.totalorder %s42, 0
      %p172 = por %p170, %p171
      %p173 = scmp.ne.s32.totalorder %s165, %s167
      %p174 = scmp.eq.s32.totalorder %s47, 1
      %p175 = por %p173, %p174
      %p176 = scmp.ne.s32.totalorder %s167, %s168
      %p177 = scmp.eq.s32.totalorder %s47, 0
      %p178 = por %p176, %p177
      %p179 = scmp.ne.s32.totalorder %s167, %s168
      %p180 = scmp.eq.s32.totalorder %s48, 1
      %p181 = por %p179, %p180
      %p183 = scmp.ne.s32.totalorder %s168, %s182
      %p184 = scmp.eq.s32.totalorder %s48, 0
      %p185 = por %p183, %p184
      %s187 = sadd.s32 %s186, 1
      %p190 = scmp.eq.s32.totalorder %s42, 1
      %p191 = scmp.ne.s32.totalorder %s186, %s188
      %p192 = scmp.eq.s32.totalorder %s42, 0
      %p193 = por %p191, %p192
      %p194 = scmp.ne.s32.totalorder %s186, %s188
      %p195 = scmp.eq.s32.totalorder %s47, 1
      %p196 = por %p194, %p195
      %p197 = scmp.ne.s32.totalorder %s188, %s189
      %p198 = scmp.eq.s32.totalorder %s47, 0
      %p199 = por %p197, %p198
      %p200 = scmp.ne.s32.totalorder %s188, %s189
      %p201 = scmp.eq.s32.totalorder %s48, 1
      %p202 = por %p200, %p201
      %p204 = scmp.ne.s32.totalorder %s189, %s203
      %p205 = scmp.eq.s32.totalorder %s48, 0
      %p206 = por %p204, %p205
      %s208 = sadd.s32 %s207, 1
      %p211 = scmp.eq.s32.totalorder %s42, 1
      %p212 = scmp.ne.s32.totalorder %s207, %s209
      %p213 = scmp.eq.s32.totalorder %s42, 0
      %p214 = por %p212, %p213
      %p215 = scmp.ne.s32.totalorder %s207, %s209
      %p216 = scmp.eq.s32.totalorder %s47, 1
      %p217 = por %p215, %p216
      %p218 = scmp.ne.s32.totalorder %s209, %s210
      %p219 = scmp.eq.s32.totalorder %s47, 0
      %p220 = por %p218, %p219
      %p221 = scmp.ne.s32.totalorder %s209, %s210
      %p222 = scmp.eq.s32.totalorder %s48, 1
      %p223 = por %p221, %p222
      %p225 = scmp.ne.s32.totalorder %s210, %s224
      %p226 = scmp.eq.s32.totalorder %s48, 0
      %p227 = por %p225, %p226
      %s229 = sadd.s32 %s228, 1
      %p232 = scmp.eq.s32.totalorder %s42, 1
      %p233 = scmp.ne.s32.totalorder %s228, %s230
      %p234 = scmp.eq.s32.totalorder %s42, 0
      %p235 = por %p233, %p234
      %p236 = scmp.ne.s32.totalorder %s228, %s230
      %p237 = scmp.eq.s32.totalorder %s47, 1
      %p238 = por %p236, %p237
      %p239 = scmp.ne.s32.totalorder %s230, %s231
      %p240 = scmp.eq.s32.totalorder %s47, 0
      %p241 = por %p239, %p240
      %p242 = scmp.ne.s32.totalorder %s230, %s231
      %p243 = scmp.eq.s32.totalorder %s48, 1
      %p244 = por %p242, %p243
      %p246 = scmp.ne.s32.totalorder %s231, %s245
      %p247 = scmp.eq.s32.totalorder %s48, 0
      %p248 = por %p246, %p247
      %s250 = sadd.s32 %s249, 1
      %p253 = scmp.eq.s32.totalorder %s42, 1
      %p254 = scmp.ne.s32.totalorder %s249, %s251
      %p255 = scmp.eq.s32.totalorder %s42, 0
      %p256 = por %p254, %p255
      %p257 = scmp.ne.s32.totalorder %s249, %s251
      %p258 = scmp.eq.s32.totalorder %s47, 1
      %p259 = por %p257, %p258
      %p260 = scmp.ne.s32.totalorder %s251, %s252
      %p261 = scmp.eq.s32.totalorder %s47, 0
      %p262 = por %p260, %p261
      %p263 = scmp.ne.s32.totalorder %s251, %s252
      %p264 = scmp.eq.s32.totalorder %s48, 1
      %p265 = por %p263, %p264
      %p267 = scmp.ne.s32.totalorder %s252, %s266
      %p268 = scmp.eq.s32.totalorder %s48, 0
      %p269 = por %p267, %p268
      %s271 = sadd.s32 %s270, 1
      %p274 = scmp.eq.s32.totalorder %s42, 1
      %p275 = scmp.ne.s32.totalorder %s270, %s272
      %p276 = scmp.eq.s32.totalorder %s42, 0
      %p277 = por %p275, %p276
      %p278 = scmp.ne.s32.totalorder %s270, %s272
      %p279 = scmp.eq.s32.totalorder %s47, 1
      %p280 = por %p278, %p279
      %p281 = scmp.ne.s32.totalorder %s272, %s273
      %p282 = scmp.eq.s32.totalorder %s47, 0
      %p283 = por %p281, %p282
      %p284 = scmp.ne.s32.totalorder %s272, %s273
      %p285 = scmp.eq.s32.totalorder %s48, 1
      %p286 = por %p284, %p285
      %p288 = scmp.ne.s32.totalorder %s273, %s287
      %p289 = scmp.eq.s32.totalorder %s48, 0
      %p290 = por %p288, %p289
      %s292 = sadd.s32 %s291, 1
      %p295 = scmp.eq.s32.totalorder %s42, 1
      %p296 = scmp.ne.s32.totalorder %s291, %s293
      %p297 = scmp.eq.s32.totalorder %s42, 0
      %p298 = por %p296, %p297
      %p299 = scmp.ne.s32.totalorder %s291, %s293
      %p300 = scmp.eq.s32.totalorder %s47, 1
      %p301 = por %p299, %p300
      %p302 = scmp.ne.s32.totalorder %s293, %s294
      %p303 = scmp.eq.s32.totalorder %s47, 0
      %p304 = por %p302, %p303
      %p305 = scmp.ne.s32.totalorder %s293, %s294
      %p306 = scmp.eq.s32.totalorder %s48, 1
      %p307 = por %p305, %p306
      %p309 = scmp.ne.s32.totalorder %s294, %s308
      %p310 = scmp.eq.s32.totalorder %s48, 0
      %p311 = por %p309, %p310
      %s313 = sadd.s32 %s312, 1
      %p316 = scmp.eq.s32.totalorder %s42, 1
      %p317 = scmp.ne.s32.totalorder %s312, %s314
      %p318 = scmp.eq.s32.totalorder %s42, 0
      %p319 = por %p317, %p318
      %p320 = scmp.ne.s32.totalorder %s312, %s314
      %p321 = scmp.eq.s32.totalorder %s47, 1
      %p322 = por %p320, %p321
      %p323 = scmp.ne.s32.totalorder %s314, %s315
      %p324 = scmp.eq.s32.totalorder %s47, 0
      %p325 = por %p323, %p324
      %p326 = scmp.ne.s32.totalorder %s314, %s315
      %p327 = scmp.eq.s32.totalorder %s48, 1
      %p328 = por %p326, %p327
      %p330 = scmp.ne.s32.totalorder %s315, %s329
      %p331 = scmp.eq.s32.totalorder %s48, 0
      %p332 = por %p330, %p331
      %s334 = sadd.s32 %s333, 1
      %p337 = scmp.eq.s32.totalorder %s42, 1
      %p338 = scmp.ne.s32.totalorder %s333, %s335
      %p339 = scmp.eq.s32.totalorder %s42, 0
      %p340 = por %p338, %p339
      %p341 = scmp.ne.s32.totalorder %s333, %s335
      %p342 = scmp.eq.s32.totalorder %s47, 1
      %p343 = por %p341, %p342
      %p344 = scmp.ne.s32.totalorder %s335, %s336
      %p345 = scmp.eq.s32.totalorder %s47, 0
      %p346 = por %p344, %p345
      %p347 = scmp.ne.s32.totalorder %s335, %s336
      %p348 = scmp.eq.s32.totalorder %s48, 1
      %p349 = por %p347, %p348
      %p351 = scmp.ne.s32.totalorder %s336, %s350
      %p352 = scmp.eq.s32.totalorder %s48, 0
      %p353 = por %p351, %p352
      %s355 = sadd.s32 %s354, 1
      %p358 = scmp.eq.s32.totalorder %s42, 1
      %p359 = scmp.ne.s32.totalorder %s354, %s356
      %p360 = scmp.eq.s32.totalorder %s42, 0
      %p361 = por %p359, %p360
      %p362 = scmp.ne.s32.totalorder %s354, %s356
      %p363 = scmp.eq.s32.totalorder %s47, 1
      %p364 = por %p362, %p363
      %p365 = scmp.ne.s32.totalorder %s356, %s357
      %p366 = scmp.eq.s32.totalorder %s47, 0
      %p367 = por %p365, %p366
      %p368 = scmp.ne.s32.totalorder %s356, %s357
      %p369 = scmp.eq.s32.totalorder %s48, 1
      %p370 = por %p368, %p369
      %p372 = scmp.ne.s32.totalorder %s357, %s371
      %p373 = scmp.eq.s32.totalorder %s48, 0
      %p374 = por %p372, %p373
      %s376 = sadd.s32 %s375, 1
      %p379 = scmp.eq.s32.totalorder %s42, 1
      %p380 = scmp.ne.s32.totalorder %s375, %s377
      %p381 = scmp.eq.s32.totalorder %s42, 0
      %p382 = por %p380, %p381
      %p383 = scmp.ne.s32.totalorder %s375, %s377
      %p384 = scmp.eq.s32.totalorder %s47, 1
      %p385 = por %p383, %p384
      %p386 = scmp.ne.s32.totalorder %s377, %s378
      %p387 = scmp.eq.s32.totalorder %s47, 0
      %p388 = por %p386, %p387
      %p389 = scmp.ne.s32.totalorder %s377, %s378
      %p390 = scmp.eq.s32.totalorder %s48, 1
      %p391 = por %p389, %p390
      %p393 = scmp.ne.s32.totalorder %s378, %s392
      %p394 = scmp.eq.s32.totalorder %s48, 0
      %p395 = por %p393, %p394
      %s397 = sadd.s32 %s396, 1
      %p400 = scmp.eq.s32.totalorder %s42, 1
      %p401 = scmp.ne.s32.totalorder %s396, %s398
      %p402 = scmp.eq.s32.totalorder %s42, 0
      %p403 = por %p401, %p402
      %p404 = scmp.ne.s32.totalorder %s396, %s398
      %p405 = scmp.eq.s32.totalorder %s47, 1
      %p406 = por %p404, %p405
      %p407 = scmp.ne.s32.totalorder %s398, %s399
      %p408 = scmp.eq.s32.totalorder %s47, 0
      %p409 = por %p407, %p408
      %p410 = scmp.ne.s32.totalorder %s398, %s399
      %p411 = scmp.eq.s32.totalorder %s48, 1
      %p412 = por %p410, %p411
      %p414 = scmp.ne.s32.totalorder %s399, %s413
      %p415 = scmp.eq.s32.totalorder %s48, 0
      %p416 = por %p414, %p415
      %s418 = sadd.s32 %s417, 1
      %p421 = scmp.eq.s32.totalorder %s42, 1
      %p422 = scmp.ne.s32.totalorder %s417, %s419
      %p423 = scmp.eq.s32.totalorder %s42, 0
      %p424 = por %p422, %p423
      %p425 = scmp.ne.s32.totalorder %s417, %s419
      %p426 = scmp.eq.s32.totalorder %s47, 1
      %p427 = por %p425, %p426
      %p428 = scmp.ne.s32.totalorder %s419, %s420
      %p429 = scmp.eq.s32.totalorder %s47, 0
      %p430 = por %p428, %p429
      %p431 = scmp.ne.s32.totalorder %s419, %s420
      %p432 = scmp.eq.s32.totalorder %s48, 1
      %p433 = por %p431, %p432
      %p435 = scmp.ne.s32.totalorder %s420, %s434
      %p436 = scmp.eq.s32.totalorder %s48, 0
      %p437 = por %p435, %p436
      %s438 = ssub.s32 %s42, %s49
      %p439 = scmp.eq.s32.totalorder %s438, 0
      %s441 = sadd.s32 %s440, 1
      %s442 = scalar_select %p439, %s440, %s441
      %p445 = pneg %p439
      %p446 = scmp.eq.s32.totalorder %s42, 1
      %p447 = por %p445, %p446
      %p448 = scmp.ne.s32.totalorder %s440, %s443
      %p449 = scmp.eq.s32.totalorder %s42, 0
      %p450 = por %p448, %p449
      %p451 = scmp.ne.s32.totalorder %s440, %s443
      %p452 = scmp.eq.s32.totalorder %s47, 1
      %p453 = por %p451, %p452
      %p454 = scmp.ne.s32.totalorder %s443, %s444
      %p455 = scmp.eq.s32.totalorder %s47, 0
      %p456 = por %p454, %p455
      %p457 = scmp.ne.s32.totalorder %s443, %s444
      %p458 = scmp.eq.s32.totalorder %s48, 1
      %p459 = por %p457, %p458
      %p461 = scmp.ne.s32.totalorder %s444, %s460
      %p462 = scmp.eq.s32.totalorder %s48, 0
      %p463 = por %p461, %p462
      %s464 = ssub.s32 %s42, %s49
      %p465 = scmp.eq.s32.totalorder %s464, 0
      %s467 = sadd.s32 %s466, 1
      %s468 = scalar_select %p465, %s466, %s467
      %p471 = pneg %p465
      %p472 = scmp.eq.s32.totalorder %s42, 1
      %p473 = por %p471, %p472
      %p474 = scmp.ne.s32.totalorder %s466, %s469
      %p475 = scmp.eq.s32.totalorder %s42, 0
      %p476 = por %p474, %p475
      %p477 = scmp.ne.s32.totalorder %s466, %s469
      %p478 = scmp.eq.s32.totalorder %s47, 1
      %p479 = por %p477, %p478
      %p480 = scmp.ne.s32.totalorder %s469, %s470
      %p481 = scmp.eq.s32.totalorder %s47, 0
      %p482 = por %p480, %p481
      %p483 = scmp.ne.s32.totalorder %s469, %s470
      %p484 = scmp.eq.s32.totalorder %s48, 1
      %p485 = por %p483, %p484
      %p487 = scmp.ne.s32.totalorder %s470, %s486
      %p488 = scmp.eq.s32.totalorder %s48, 0
      %p489 = por %p487, %p488
      %s490 = ssub.s32 %s42, %s49
      %p491 = scmp.eq.s32.totalorder %s490, 0
      %s493 = sadd.s32 %s492, 1
      %s494 = scalar_select %p491, %s492, %s493
      %p497 = pneg %p491
      %p498 = scmp.eq.s32.totalorder %s42, 1
      %p499 = por %p497, %p498
      %p500 = scmp.ne.s32.totalorder %s492, %s495
      %p501 = scmp.eq.s32.totalorder %s42, 0
      %p502 = por %p500, %p501
      %p503 = scmp.ne.s32.totalorder %s492, %s495
      %p504 = scmp.eq.s32.totalorder %s47, 1
      %p505 = por %p503, %p504
      %p506 = scmp.ne.s32.totalorder %s495, %s496
      %p507 = scmp.eq.s32.totalorder %s47, 0
      %p508 = por %p506, %p507
      %p509 = scmp.ne.s32.totalorder %s495, %s496
      %p510 = scmp.eq.s32.totalorder %s48, 1
      %p511 = por %p509, %p510
      %p513 = scmp.ne.s32.totalorder %s496, %s512
      %p514 = scmp.eq.s32.totalorder %s48, 0
      %p515 = por %p513, %p514
      %s516 = ssub.s32 %s42, %s49
      %p517 = scmp.eq.s32.totalorder %s516, 0
      %s519 = sadd.s32 %s518, 1
      %s520 = scalar_select %p517, %s518, %s519
      %p523 = pneg %p517
      %p524 = scmp.eq.s32.totalorder %s42, 1
      %p525 = por %p523, %p524
      %p526 = scmp.ne.s32.totalorder %s518, %s521
      %p527 = scmp.eq.s32.totalorder %s42, 0
      %p528 = por %p526, %p527
      %p529 = scmp.ne.s32.totalorder %s518, %s521
      %p530 = scmp.eq.s32.totalorder %s47, 1
      %p531 = por %p529, %p530
      %p532 = scmp.ne.s32.totalorder %s521, %s522
      %p533 = scmp.eq.s32.totalorder %s47, 0
      %p534 = por %p532, %p533
      %p535 = scmp.ne.s32.totalorder %s521, %s522
      %p536 = scmp.eq.s32.totalorder %s48, 1
      %p537 = por %p535, %p536
      %p539 = scmp.ne.s32.totalorder %s522, %s538
      %p540 = scmp.eq.s32.totalorder %s48, 0
      %p541 = por %p539, %p540
      %p542 = scmp.le.s32.totalorder 1, %s42
      %p543 = scmp.lt.s32.totalorder %s42, 3
      %p544 = pnand %p542, %p543
      %p545 = pneg %p544
      // Predicated region
      $region9: #{tpu_custom_call.1} parent=5 // pred_check
        _
      $region10: #{tpu_custom_call.1} parent=5 // pred_check_branch
        %547 = sbr.rel (%p544) target = $region12
      $region11: #{tpu_custom_call.1} parent=5 // pred_region
        %s548 = ssub.s32 %s42, 1
        // Predicated region
        $region13: #{tpu_custom_call.1} parent=11 // pred_check
          %p549 = pneg %p115
        $region14: #{tpu_custom_call.1} parent=11 // pred_check_branch
          %551 = sbr.rel (%p549) target = $region16
        $region15: #{tpu_custom_call.1} parent=11 // pred_region
          _
        $region16: #{tpu_custom_call.1} parent=11 // pred_fallthru
          _
        // Predicated region
        $region17: #{tpu_custom_call.1} parent=11 // pred_check
          %p552 = pneg %p136
        $region18: #{tpu_custom_call.1} parent=11 // pred_check_branch
          %554 = sbr.rel (%p552) target = $region20
        $region19: #{tpu_custom_call.1} parent=11 // pred_region
          %556 = vsyncadd [#allocation6], 0
          %s558 = sshll.u32 %s3, 4
          %s559 = int_to_ptr.hbm [resolvable:$true] %s558
          %s560 = sshll.u32 [#allocation5], 4
          %s561 = int_to_ptr.vmem [resolvable:$true] %s560
          %563 = dma.hbm_to_vmem [thread:$0]  %s559, 16, %s561, [#allocation6]
        $region20: #{tpu_custom_call.1} parent=11 // pred_fallthru
          _
        // Predicated region
        $region21: #{tpu_custom_call.1} parent=11 // pred_check
          %p564 = pneg %p157
        $region22: #{tpu_custom_call.1} parent=11 // pred_check_branch
          %566 = sbr.rel (%p564) target = $region24
        $region23: #{tpu_custom_call.1} parent=11 // pred_region
          _
        $region24: #{tpu_custom_call.1} parent=11 // pred_fallthru
          _
        // Predicated region
        $region25: #{tpu_custom_call.1} parent=11 // pred_check
          %p567 = pneg %p178
        $region26: #{tpu_custom_call.1} parent=11 // pred_check_branch
          %569 = sbr.rel (%p567) target = $region28
        $region27: #{tpu_custom_call.1} parent=11 // pred_region
          _
        $region28: #{tpu_custom_call.1} parent=11 // pred_fallthru
          _
        // Predicated region
        $region29: #{tpu_custom_call.1} parent=11 // pred_check
          %p570 = pneg %p199
        $region30: #{tpu_custom_call.1} parent=11 // pred_check_branch
          %572 = sbr.rel (%p570) target = $region32
        $region31: #{tpu_custom_call.1} parent=11 // pred_region
          _
        $region32: #{tpu_custom_call.1} parent=11 // pred_fallthru
          _
        // Predicated region
        $region33: #{tpu_custom_call.1} parent=11 // pred_check
          %p573 = pneg %p220
        $region34: #{tpu_custom_call.1} parent=11 // pred_check_branch
          %575 = sbr.rel (%p573) target = $region36
        $region35: #{tpu_custom_call.1} parent=11 // pred_region
          _
        $region36: #{tpu_custom_call.1} parent=11 // pred_fallthru
          _
        // Predicated region
        $region37: #{tpu_custom_call.1} parent=11 // pred_check
          %p576 = pneg %p241
        $region38: #{tpu_custom_call.1} parent=11 // pred_check_branch
          %578 = sbr.rel (%p576) target = $region40
        $region39: #{tpu_custom_call.1} parent=11 // pred_region
          _
        $region40: #{tpu_custom_call.1} parent=11 // pred_fallthru
          _
        // Predicated region
        $region41: #{tpu_custom_call.1} parent=11 // pred_check
          %p579 = pneg %p262
        $region42: #{tpu_custom_call.1} parent=11 // pred_check_branch
          %581 = sbr.rel (%p579) target = $region44
        $region43: #{tpu_custom_call.1} parent=11 // pred_region
          _
        $region44: #{tpu_custom_call.1} parent=11 // pred_fallthru
          _
        // Predicated region
        $region45: #{tpu_custom_call.1} parent=11 // pred_check
          %p582 = pneg %p283
        $region46: #{tpu_custom_call.1} parent=11 // pred_check_branch
          %584 = sbr.rel (%p582) target = $region48
        $region47: #{tpu_custom_call.1} parent=11 // pred_region
          _
        $region48: #{tpu_custom_call.1} parent=11 // pred_fallthru
          _
        // Predicated region
        $region49: #{tpu_custom_call.1} parent=11 // pred_check
          %p585 = pneg %p304
        $region50: #{tpu_custom_call.1} parent=11 // pred_check_branch
          %587 = sbr.rel (%p585) target = $region52
        $region51: #{tpu_custom_call.1} parent=11 // pred_region
          _
        $region52: #{tpu_custom_call.1} parent=11 // pred_fallthru
          _
        // Predicated region
        $region53: #{tpu_custom_call.1} parent=11 // pred_check
          %p588 = pneg %p325
        $region54: #{tpu_custom_call.1} parent=11 // pred_check_branch
          %590 = sbr.rel (%p588) target = $region56
        $region55: #{tpu_custom_call.1} parent=11 // pred_region
          %592 = vsyncadd [#allocation6], 0
          %s593 = sshll.u32 %s12, 4
          %s594 = int_to_ptr.hbm [resolvable:$true] %s593
          %s595 = sshll.u32 [#allocation7], 4
          %s596 = int_to_ptr.vmem [resolvable:$true] %s595
          %601 = dma.hbm_to_vmem [thread:$0]  %s594, 256, %s596, [#allocation6], 128, 128, 8
        $region56: #{tpu_custom_call.1} parent=11 // pred_fallthru
          _
        // Predicated region
        $region57: #{tpu_custom_call.1} parent=11 // pred_check
          %p602 = pneg %p346
        $region58: #{tpu_custom_call.1} parent=11 // pred_check_branch
          %604 = sbr.rel (%p602) target = $region60
        $region59: #{tpu_custom_call.1} parent=11 // pred_region
          _
        $region60: #{tpu_custom_call.1} parent=11 // pred_fallthru
          _
        // Predicated region
        $region61: #{tpu_custom_call.1} parent=11 // pred_check
          %p605 = pneg %p367
        $region62: #{tpu_custom_call.1} parent=11 // pred_check_branch
          %607 = sbr.rel (%p605) target = $region64
        $region63: #{tpu_custom_call.1} parent=11 // pred_region
          %609 = vsyncadd [#allocation9], 0
          %s610 = sshll.u32 %s14, 4
          %s611 = int_to_ptr.hbm [resolvable:$true] %s610
          %s612 = sshll.u32 [#allocation8], 4
          %s613 = int_to_ptr.vmem [resolvable:$true] %s612
          %618 = dma.hbm_to_vmem [thread:$0]  %s611, 1024, %s613, [#allocation9], 128, 128, 8
        $region64: #{tpu_custom_call.1} parent=11 // pred_fallthru
          _
        // Predicated region
        $region65: #{tpu_custom_call.1} parent=11 // pred_check
          %p619 = pneg %p388
        $region66: #{tpu_custom_call.1} parent=11 // pred_check_branch
          %621 = sbr.rel (%p619) target = $region68
        $region67: #{tpu_custom_call.1} parent=11 // pred_region
          _
        $region68: #{tpu_custom_call.1} parent=11 // pred_fallthru
          _
        // Predicated region
        $region69: #{tpu_custom_call.1} parent=11 // pred_check
          %p622 = pneg %p409
        $region70: #{tpu_custom_call.1} parent=11 // pred_check_branch
          %624 = sbr.rel (%p622) target = $region72
        $region71: #{tpu_custom_call.1} parent=11 // pred_region
          %626 = vsyncadd [#allocation9], 0
          %s627 = sshll.u32 %s16, 4
          %s628 = int_to_ptr.hbm [resolvable:$true] %s627
          %s629 = sshll.u32 [#allocation10], 4
          %s630 = int_to_ptr.vmem [resolvable:$true] %s629
          %635 = dma.hbm_to_vmem [thread:$0]  %s628, 2048, %s630, [#allocation9], 128, 128, 8
        $region72: #{tpu_custom_call.1} parent=11 // pred_fallthru
          _
        // Predicated region
        $region73: #{tpu_custom_call.1} parent=11 // pred_check
          %p636 = pneg %p430
        $region74: #{tpu_custom_call.1} parent=11 // pred_check_branch
          %638 = sbr.rel (%p636) target = $region76
        $region75: #{tpu_custom_call.1} parent=11 // pred_region
          _
        $region76: #{tpu_custom_call.1} parent=11 // pred_fallthru
          _
      $region12: #{tpu_custom_call.1} parent=5 // pred_fallthru
        _
      %p639 = scmp.lt.s32.totalorder %s42, 2
      // Predicated region
      $region77: #{tpu_custom_call.1} parent=5 // pred_check
        %p640 = pneg %p639
      $region78: #{tpu_custom_call.1} parent=5 // pred_check_branch
        %642 = sbr.rel (%p640) target = $region80
      $region79: #{tpu_custom_call.1} parent=5 // pred_region
        // Predicated region
        $region81: #{tpu_custom_call.1} parent=79 // pred_check
          %p643 = pneg %p62
        $region82: #{tpu_custom_call.1} parent=79 // pred_check_branch
          %645 = sbr.rel (%p643) target = $region84
        $region83: #{tpu_custom_call.1} parent=79 // pred_region
          %p646 = scmp.lt.s32.totalorder %s42, 1
          %s647 = scalar_select %p646, %s42, 1
          %s648 = smul.addr %s647, 8
          %s649 = scalar_lea.vmem %s0, %s648
        $region84: #{tpu_custom_call.1} parent=79 // pred_fallthru
          _
        // Predicated region
        $region85: #{tpu_custom_call.1} parent=79 // pred_check
          %p650 = pneg %p88
        $region86: #{tpu_custom_call.1} parent=79 // pred_check_branch
          %652 = sbr.rel (%p650) target = $region88
        $region87: #{tpu_custom_call.1} parent=79 // pred_region
          %s653 = sand.u32 %s78, 1
          %s654 = scalar_lea.sflag [#allocation3], %s653
          %s655 = sand.u32 %s78, 1
          %s656 = smul.addr %s655, 8
          %s657 = scalar_lea.vmem [#allocation2], %s656
          %659 = vsyncadd %s654, 0
          %s660 = smul.addr %s42, 8
          %s661 = scalar_lea.hbm %s1, %s660
          %s663 = sshll.u32 %s661, 4
          %s664 = int_to_ptr.hbm [resolvable:$true] %s663
          %s665 = sshll.u32 %s657, 4
          %s666 = int_to_ptr.vmem [resolvable:$true] %s665
          %668 = dma.hbm_to_vmem [thread:$0]  %s664, 128, %s666, %s654
        $region88: #{tpu_custom_call.1} parent=79 // pred_fallthru
          _
      $region80: #{tpu_custom_call.1} parent=5 // pred_fallthru
        _
      %p669 = scmp.le.s32.totalorder 1, %s42
      %p670 = scmp.lt.s32.totalorder %s42, 3
      %p671 = pnand %p669, %p670
      %p672 = pneg %p671
      // Predicated region
      $region89: #{tpu_custom_call.1} parent=5 // pred_check
        _
      $region90: #{tpu_custom_call.1} parent=5 // pred_check_branch
        %674 = sbr.rel (%p671) target = $region92
      $region91: #{tpu_custom_call.1} parent=5 // pred_region
        %s675 = ssub.s32 %s42, 1
        %s676 = sand.u32 %s81, 1
        %s677 = scalar_lea.sflag [#allocation3], %s676
        %s678 = sand.u32 %s81, 1
        %s679 = smul.addr %s678, 8
        %s680 = scalar_lea.vmem [#allocation2], %s679
        // Predicated region
        $region93: #{tpu_custom_call.1} parent=91 // pred_check
          %p681 = pneg %p94
        $region94: #{tpu_custom_call.1} parent=91 // pred_check_branch
          %683 = sbr.rel (%p681) target = $region96
        $region95: #{tpu_custom_call.1} parent=91 // pred_region
          %685 = dma.done %s677, 128
        $region96: #{tpu_custom_call.1} parent=91 // pred_fallthru
          _
        // Predicated region
        $region97: #{tpu_custom_call.1} parent=91 // pred_check
          %p686 = pneg %p136
        $region98: #{tpu_custom_call.1} parent=91 // pred_check_branch
          %688 = sbr.rel (%p686) target = $region100
        $region99: #{tpu_custom_call.1} parent=91 // pred_region
          %690 = dma.done [#allocation6], 16
        $region100: #{tpu_custom_call.1} parent=91 // pred_fallthru
          _
        // Predicated region
        $region101: #{tpu_custom_call.1} parent=91 // pred_check
          %p691 = pneg %p325
        $region102: #{tpu_custom_call.1} parent=91 // pred_check_branch
          %693 = sbr.rel (%p691) target = $region104
        $region103: #{tpu_custom_call.1} parent=91 // pred_region
          %695 = dma.done [#allocation6], 256
        $region104: #{tpu_custom_call.1} parent=91 // pred_fallthru
          _
        // Predicated region
        $region105: #{tpu_custom_call.1} parent=91 // pred_check
          %p696 = pneg %p367
        $region106: #{tpu_custom_call.1} parent=91 // pred_check_branch
          %698 = sbr.rel (%p696) target = $region108
        $region107: #{tpu_custom_call.1} parent=91 // pred_region
          %700 = dma.done [#allocation9], 1024
        $region108: #{tpu_custom_call.1} parent=91 // pred_fallthru
          _
        // Predicated region
        $region109: #{tpu_custom_call.1} parent=91 // pred_check
          %p701 = pneg %p409
        $region110: #{tpu_custom_call.1} parent=91 // pred_check_branch
          %703 = sbr.rel (%p701) target = $region112
        $region111: #{tpu_custom_call.1} parent=91 // pred_region
          %705 = dma.done [#allocation9], 2048
        $region112: #{tpu_custom_call.1} parent=91 // pred_fallthru
          _
        %p706 = scmp.lt.s32.totalorder %s47, 1
        %s707 = scalar_select %p706, %s47, 1
        %s708 = smul.addr %s707, 8
        %s709 = scalar_lea.vmem %s0, %s708
        %p710 = pneg %p68
        %p711 = pneg %p65
        %s712 = sand.u32 %s81, 1
        %s713 = scalar_lea.sflag [#allocation3], %s712
        %s714 = sand.u32 %s81, 1
        %s715 = smul.addr %s714, 8
        %s716 = scalar_lea.vmem [#allocation2], %s715
        %p717 = pneg %p94
        %p718 = pneg %p91
        %p719 = pneg %p115
        %p720 = pneg %p112
        %p721 = pneg %p136
        %p722 = pneg %p133
        %p723 = pneg %p157
        %p724 = pneg %p154
        %p725 = pneg %p178
        %p726 = pneg %p175
        %p727 = pneg %p199
        %p728 = pneg %p196
        %p729 = pneg %p220
        %p730 = pneg %p217
        %p731 = pneg %p241
        %p732 = pneg %p238
        %p733 = pneg %p262
        %p734 = pneg %p259
        %p735 = pneg %p283
        %p736 = pneg %p280
        %p737 = pneg %p304
        %p738 = pneg %p301
        %p739 = pneg %p325
        %p740 = pneg %p322
        %p741 = pneg %p346
        %p742 = pneg %p343
        %p743 = pneg %p367
        %p744 = pneg %p364
        %p745 = pneg %p388
        %p746 = pneg %p385
        %p747 = pneg %p409
        %p748 = pneg %p406
        %p749 = pneg %p430
        %p750 = pneg %p427
        %p751 = pneg %p456
        %p752 = pneg %p453
        %s753 = sand.u32 %s443, 1
        %s754 = scalar_lea.sflag [#allocation4], %s753
        %s755 = sand.u32 %s443, 1
        %s756 = smul.addr %s755, 8
        %s757 = scalar_lea.vmem [#allocation11], %s756
        %p758 = pneg %p482
        %p759 = pneg %p479
        %s760 = sand.u32 %s47, 1
        %s761 = scalar_lea.sflag [#allocation13], %s760
        %s762 = sand.u32 %s469, 1
        %s763 = smul.addr %s762, 8
        %s764 = scalar_lea.vmem [#allocation12], %s763
        %p765 = pneg %p508
        %p766 = pneg %p505
        %s767 = sand.u32 %s47, 1
        %s768 = scalar_lea.sflag [#allocation13], %s767
        %s769 = sand.u32 %s495, 1
        %s770 = smul.addr %s769, 8
        %s771 = scalar_lea.vmem [#allocation14], %s770
        %p772 = pneg %p534
        %p773 = pneg %p531
        %s774 = sand.u32 %s521, 1
        %s775 = scalar_lea.sflag [#allocation16], %s774
        %s776 = sand.u32 %s521, 1
        %s777 = smul.addr %s776, 8
        %s778 = scalar_lea.vmem [#allocation15], %s777
        %p779 = scmp.lt.s32.totalorder %s47, 1
        %s780 = scalar_select %p779, %s47, 1
        %s781 = smul.addr %s780, 8
        %s782 = scalar_lea.vmem %s0, %s781
        %v783 = vld [vmem:[%s782] sm:$0xff]
        %v784 = vld [vmem:[%s2] sm:$0xff]
        %v785 = vld [vmem:[%s2 + $0x8] sm:$0xff]
        %v786 = vld [vmem:[%s2 + $0x10] sm:$0xff]
        %v787 = vld [vmem:[%s2 + $0x18] sm:$0xff]
        %v788 = vld [vmem:[%s2 + $0x20] sm:$0xff]
        %v789 = vld [vmem:[%s2 + $0x28] sm:$0xff]
        %v790 = vld [vmem:[%s2 + $0x30] sm:$0xff]
        %v791 = vld [vmem:[%s2 + $0x38] sm:$0xff]
        %v792 = vld [vmem:[%s2 + $0x40] sm:$0xff]
        %v793 = vld [vmem:[%s2 + $0x48] sm:$0xff]
        %v794 = vld [vmem:[%s2 + $0x50] sm:$0xff]
        %v795 = vld [vmem:[%s2 + $0x58] sm:$0xff]
        %v796 = vld [vmem:[%s2 + $0x60] sm:$0xff]
        %v797 = vld [vmem:[%s2 + $0x68] sm:$0xff]
        %v798 = vld [vmem:[%s2 + $0x70] sm:$0xff]
        %v799 = vld [vmem:[%s2 + $0x78] sm:$0x1]
        %v800 = vld [vmem:[#allocation5] sm:$0x1]
        %v802 = vperm.slane %v800, 0
        %vm804 = vcmask 990208
        %v806 = vsel %vm804, %v783, 0
        %vm808 = vcmask 1040384
        %v810 = vsel %vm808, %v799, 0
        %812 = vmatpush.msra.mxu0 %v810
        %813 = vmatpush.msra.mxu0 %v798
        %814 = vmatpush.msra.mxu0 %v797
        %815 = vmatpush.msra.mxu0 %v796
        %816 = vmatpush.msra.mxu0 %v795
        %817 = vmatpush.msra.mxu0 %v794
        %818 = vmatpush.msra.mxu0 %v793
        %819 = vmatpush.msra.mxu0 %v792
        %820 = vmatpush.msra.mxu0 %v791
        %821 = vmatpush.msra.mxu0 %v790
        %822 = vmatpush.msra.mxu0 %v789
        %823 = vmatpush.msra.mxu0 %v788
        %824 = vmatpush.msra.mxu0 %v787
        %825 = vmatpush.msra.mxu0 %v786
        %826 = vmatpush.msra.mxu0 %v785
        %827 = vmatpush.msra.mxu0 %v784
        %828 = vmatmul.f32.gmra.mxu0 %v806
        %v829 = vpop.f32.mrf.mxu0
        %v830 = vadd.f32 %v802, %v829
        %831 = vdwg.mxu0
        %v832 = vmul.f32 %v830, 0.1
        %v833 = vmax.f32 %v830, %v832
        %v834 = vld [vmem:[%s4] sm:$0xff]
        %v835 = vld [vmem:[%s4 + $0x8] sm:$0xff]
        %v836 = vld [vmem:[%s4 + $0x10] sm:$0xff]
        %v837 = vld [vmem:[%s4 + $0x18] sm:$0xff]
        %v838 = vld [vmem:[%s4 + $0x20] sm:$0xff]
        %v839 = vld [vmem:[%s4 + $0x28] sm:$0xff]
        %v840 = vld [vmem:[%s4 + $0x30] sm:$0xff]
        %v841 = vld [vmem:[%s4 + $0x38] sm:$0xff]
        %v842 = vld [vmem:[%s4 + $0x40] sm:$0xff]
        %v843 = vld [vmem:[%s4 + $0x48] sm:$0xff]
        %v844 = vld [vmem:[%s4 + $0x50] sm:$0xff]
        %v845 = vld [vmem:[%s4 + $0x58] sm:$0xff]
        %v846 = vld [vmem:[%s4 + $0x60] sm:$0xff]
        %v847 = vld [vmem:[%s4 + $0x68] sm:$0xff]
        %v848 = vld [vmem:[%s4 + $0x70] sm:$0xff]
        %v849 = vld [vmem:[%s4 + $0x78] sm:$0xff]
        %v850 = vld [vmem:[%s5] sm:$0x1]
        %v852 = vperm.slane %v850, 0
        %854 = vmatpush.msra.mxu0 %v849
        %855 = vmatpush.msra.mxu0 %v848
        %856 = vmatpush.msra.mxu0 %v847
        %857 = vmatpush.msra.mxu0 %v846
        %858 = vmatpush.msra.mxu0 %v845
        %859 = vmatpush.msra.mxu0 %v844
        %860 = vmatpush.msra.mxu0 %v843
        %861 = vmatpush.msra.mxu0 %v842
        %862 = vmatpush.msra.mxu0 %v841
        %863 = vmatpush.msra.mxu0 %v840
        %864 = vmatpush.msra.mxu0 %v839
        %865 = vmatpush.msra.mxu0 %v838
        %866 = vmatpush.msra.mxu0 %v837
        %867 = vmatpush.msra.mxu0 %v836
        %868 = vmatpush.msra.mxu0 %v835
        %869 = vmatpush.msra.mxu0 %v834
        %870 = vmatmul.f32.gmra.mxu0 %v833
        %v871 = vpop.f32.mrf.mxu0
        %v872 = vadd.f32 %v852, %v871
        %873 = vdwg.mxu0
        %v874 = vmul.f32 %v872, 0.1
        %v875 = vmax.f32 %v872, %v874
        %v876 = vld [vmem:[%s6] sm:$0xff]
        %v877 = vld [vmem:[%s6 + $0x8] sm:$0xff]
        %v878 = vld [vmem:[%s6 + $0x10] sm:$0xff]
        %v879 = vld [vmem:[%s6 + $0x18] sm:$0xff]
        %v880 = vld [vmem:[%s6 + $0x20] sm:$0xff]
        %v881 = vld [vmem:[%s6 + $0x28] sm:$0xff]
        %v882 = vld [vmem:[%s6 + $0x30] sm:$0xff]
        %v883 = vld [vmem:[%s6 + $0x38] sm:$0xff]
        %v884 = vld [vmem:[%s6 + $0x40] sm:$0xff]
        %v885 = vld [vmem:[%s6 + $0x48] sm:$0xff]
        %v886 = vld [vmem:[%s6 + $0x50] sm:$0xff]
        %v887 = vld [vmem:[%s6 + $0x58] sm:$0xff]
        %v888 = vld [vmem:[%s6 + $0x60] sm:$0xff]
        %v889 = vld [vmem:[%s6 + $0x68] sm:$0xff]
        %v890 = vld [vmem:[%s6 + $0x70] sm:$0xff]
        %v891 = vld [vmem:[%s6 + $0x78] sm:$0xff]
        %v892 = vld [vmem:[%s7] sm:$0x1]
        %v894 = vperm.slane %v892, 0
        %896 = vmatpush.msra.mxu0 %v891
        %897 = vmatpush.msra.mxu0 %v890
        %898 = vmatpush.msra.mxu0 %v889
        %899 = vmatpush.msra.mxu0 %v888
        %900 = vmatpush.msra.mxu0 %v887
        %901 = vmatpush.msra.mxu0 %v886
        %902 = vmatpush.msra.mxu0 %v885
        %903 = vmatpush.msra.mxu0 %v884
        %904 = vmatpush.msra.mxu0 %v883
        %905 = vmatpush.msra.mxu0 %v882
        %906 = vmatpush.msra.mxu0 %v881
        %907 = vmatpush.msra.mxu0 %v880
        %908 = vmatpush.msra.mxu0 %v879
        %909 = vmatpush.msra.mxu0 %v878
        %910 = vmatpush.msra.mxu0 %v877
        %911 = vmatpush.msra.mxu0 %v876
        %912 = vmatmul.f32.gmra.mxu0 %v875
        %v913 = vpop.f32.mrf.mxu0
        %v914 = vadd.f32 %v894, %v913
        %915 = vdwg.mxu0
        %v916 = vmul.f32 %v914, 0.1
        %v917 = vmax.f32 %v914, %v916
        %v918 = vld [vmem:[%s8] sm:$0xff]
        %v919 = vld [vmem:[%s8 + $0x8] sm:$0xff]
        %v920 = vld [vmem:[%s8 + $0x10] sm:$0xff]
        %v921 = vld [vmem:[%s8 + $0x18] sm:$0xff]
        %v922 = vld [vmem:[%s8 + $0x20] sm:$0xff]
        %v923 = vld [vmem:[%s8 + $0x28] sm:$0xff]
        %v924 = vld [vmem:[%s8 + $0x30] sm:$0xff]
        %v925 = vld [vmem:[%s8 + $0x38] sm:$0xff]
        %v926 = vld [vmem:[%s9] sm:$0x1]
        %v928 = vperm.slane %v926, 0
        %vm930 = vcmask 523264
        %v932 = vsel %vm930, %v917, 0
        %934 = vmatpush.msra.mxu0 0.0
        %935 = vmatpush.msra.mxu0 0.0
        %936 = vmatpush.msra.mxu0 0.0
        %937 = vmatpush.msra.mxu0 0.0
        %938 = vmatpush.msra.mxu0 0.0
        %939 = vmatpush.msra.mxu0 0.0
        %940 = vmatpush.msra.mxu0 0.0
        %941 = vmatpush.msra.mxu0 0.0
        %942 = vmatpush.msra.mxu0 %v925
        %943 = vmatpush.msra.mxu0 %v924
        %944 = vmatpush.msra.mxu0 %v923
        %945 = vmatpush.msra.mxu0 %v922
        %946 = vmatpush.msra.mxu0 %v921
        %947 = vmatpush.msra.mxu0 %v920
        %948 = vmatpush.msra.mxu0 %v919
        %949 = vmatpush.msra.mxu0 %v918
        %950 = vmatmul.f32.gmra.mxu0 %v932
        %v951 = vpop.f32.mrf.mxu0
        %v952 = vadd.f32 %v928, %v951
        %953 = vdwg.mxu0
        %v954 = vld [vmem:[%s10] sm:$0xff]
        %v955 = vld [vmem:[%s10 + $0x8] sm:$0xff]
        %v956 = vld [vmem:[%s10 + $0x10] sm:$0xff]
        %v957 = vld [vmem:[%s10 + $0x18] sm:$0xff]
        %v958 = vld [vmem:[%s10 + $0x20] sm:$0xff]
        %v959 = vld [vmem:[%s10 + $0x28] sm:$0xff]
        %v960 = vld [vmem:[%s10 + $0x30] sm:$0xff]
        %v961 = vld [vmem:[%s10 + $0x38] sm:$0xff]
        %v962 = vld [vmem:[%s11] sm:$0x1]
        %v964 = vperm.slane %v962, 0
        %966 = vmatpush.msra.mxu0 0.0
        %967 = vmatpush.msra.mxu0 0.0
        %968 = vmatpush.msra.mxu0 0.0
        %969 = vmatpush.msra.mxu0 0.0
        %970 = vmatpush.msra.mxu0 0.0
        %971 = vmatpush.msra.mxu0 0.0
        %972 = vmatpush.msra.mxu0 0.0
        %973 = vmatpush.msra.mxu0 0.0
        %974 = vmatpush.msra.mxu0 %v961
        %975 = vmatpush.msra.mxu0 %v960
        %976 = vmatpush.msra.mxu0 %v959
        %977 = vmatpush.msra.mxu0 %v958
        %978 = vmatpush.msra.mxu0 %v957
        %979 = vmatpush.msra.mxu0 %v956
        %980 = vmatpush.msra.mxu0 %v955
        %981 = vmatpush.msra.mxu0 %v954
        %982 = vmatmul.f32.gmra.mxu0 %v932
        %v983 = vpop.f32.mrf.mxu0
        %v984 = vadd.f32 %v964, %v983
        %985 = vdwg.mxu0
        %v986 = vld [vmem:[%s680] sm:$0xff]
        %v987 = vmul.f32 %v984, 0.5
        %v988 = vmul.f32 %v987, 1.442695
        %v989 = vpow.pop %v988
        %v990 = vmul.f32 %v986, %v989
        %v991 = vadd.f32 %v952, %v990
        %v992 = vld [vmem:[#allocation7] sm:$0xff]
        %v993 = vld [vmem:[#allocation7 + $0x8] sm:$0xff]
        %v994 = vld [vmem:[%s13] sm:$0x1]
        %v996 = vperm.slane %v994, 0
        %vm998 = vcmask 130048
        %v1000 = vsel %vm998, %v991, 0
        %1002 = vmatpush.msra.mxu0 0.0
        %1003 = vmatpush.msra.mxu0 0.0
        %1004 = vmatpush.msra.mxu0 0.0
        %1005 = vmatpush.msra.mxu0 0.0
        %1006 = vmatpush.msra.mxu0 0.0
        %1007 = vmatpush.msra.mxu0 0.0
        %1008 = vmatpush.msra.mxu0 0.0
        %1009 = vmatpush.msra.mxu0 0.0
        %1010 = vmatpush.msra.mxu0 0.0
        %1011 = vmatpush.msra.mxu0 0.0
        %1012 = vmatpush.msra.mxu0 0.0
        %1013 = vmatpush.msra.mxu0 0.0
        %1014 = vmatpush.msra.mxu0 0.0
        %1015 = vmatpush.msra.mxu0 0.0
        %1016 = vmatpush.msra.mxu0 %v993
        %1017 = vmatpush.msra.mxu0 %v992
        %1018 = vmatmul.f32.gmra.mxu0 %v1000
        %v1019 = vpop.f32.mrf.mxu0
        %v1020 = vadd.f32 %v996, %v1019
        %1021 = vdwg.mxu0
        %v1022 = vmul.f32 %v1020, 0.1
        %v1023 = vmax.f32 %v1020, %v1022
        %v1024 = vld [vmem:[#allocation8] sm:$0xff]
        %v1025 = vld [vmem:[#allocation8 + $0x8] sm:$0xff]
        %v1026 = vld [vmem:[#allocation8 + $0x10] sm:$0xff]
        %v1027 = vld [vmem:[#allocation8 + $0x18] sm:$0xff]
        %v1028 = vld [vmem:[#allocation8 + $0x20] sm:$0xff]
        %v1029 = vld [vmem:[#allocation8 + $0x28] sm:$0xff]
        %v1030 = vld [vmem:[#allocation8 + $0x30] sm:$0xff]
        %v1031 = vld [vmem:[#allocation8 + $0x38] sm:$0xff]
        %v1032 = vld [vmem:[%s15] sm:$0x1]
        %v1034 = vperm.slane %v1032, 0
        %v1037 = vsel %vm930, %v1023, 0
        %1039 = vmatpush.msra.mxu0 0.0
        %1040 = vmatpush.msra.mxu0 0.0
        %1041 = vmatpush.msra.mxu0 0.0
        %1042 = vmatpush.msra.mxu0 0.0
        %1043 = vmatpush.msra.mxu0 0.0
        %1044 = vmatpush.msra.mxu0 0.0
        %1045 = vmatpush.msra.mxu0 0.0
        %1046 = vmatpush.msra.mxu0 0.0
        %1047 = vmatpush.msra.mxu0 %v1031
        %1048 = vmatpush.msra.mxu0 %v1030
        %1049 = vmatpush.msra.mxu0 %v1029
        %1050 = vmatpush.msra.mxu0 %v1028
        %1051 = vmatpush.msra.mxu0 %v1027
        %1052 = vmatpush.msra.mxu0 %v1026
        %1053 = vmatpush.msra.mxu0 %v1025
        %1054 = vmatpush.msra.mxu0 %v1024
        %1055 = vmatmul.f32.gmra.mxu0 %v1037
        %v1056 = vpop.f32.mrf.mxu0
        %v1057 = vadd.f32 %v1034, %v1056
        %1058 = vdwg.mxu0
        %v1059 = vmul.f32 %v1057, 0.1
        %v1060 = vmax.f32 %v1057, %v1059
        %v1061 = vld [vmem:[#allocation10] sm:$0xff]
        %v1062 = vld [vmem:[#allocation10 + $0x8] sm:$0xff]
        %v1063 = vld [vmem:[#allocation10 + $0x10] sm:$0xff]
        %v1064 = vld [vmem:[#allocation10 + $0x18] sm:$0xff]
        %v1065 = vld [vmem:[#allocation10 + $0x20] sm:$0xff]
        %v1066 = vld [vmem:[#allocation10 + $0x28] sm:$0xff]
        %v1067 = vld [vmem:[#allocation10 + $0x30] sm:$0xff]
        %v1068 = vld [vmem:[#allocation10 + $0x38] sm:$0xff]
        %v1069 = vld [vmem:[#allocation10 + $0x40] sm:$0xff]
        %v1070 = vld [vmem:[#allocation10 + $0x48] sm:$0xff]
        %v1071 = vld [vmem:[#allocation10 + $0x50] sm:$0xff]
        %v1072 = vld [vmem:[#allocation10 + $0x58] sm:$0xff]
        %v1073 = vld [vmem:[#allocation10 + $0x60] sm:$0xff]
        %v1074 = vld [vmem:[#allocation10 + $0x68] sm:$0xff]
        %v1075 = vld [vmem:[#allocation10 + $0x70] sm:$0xff]
        %v1076 = vld [vmem:[#allocation10 + $0x78] sm:$0xff]
        %v1077 = vld [vmem:[%s17] sm:$0x1]
        %v1079 = vperm.slane %v1077, 0
        %1081 = vmatpush.msra.mxu0 %v1076
        %1082 = vmatpush.msra.mxu0 %v1075
        %1083 = vmatpush.msra.mxu0 %v1074
        %1084 = vmatpush.msra.mxu0 %v1073
        %1085 = vmatpush.msra.mxu0 %v1072
        %1086 = vmatpush.msra.mxu0 %v1071
        %1087 = vmatpush.msra.mxu0 %v1070
        %1088 = vmatpush.msra.mxu0 %v1069
        %1089 = vmatpush.msra.mxu0 %v1068
        %1090 = vmatpush.msra.mxu0 %v1067
        %1091 = vmatpush.msra.mxu0 %v1066
        %1092 = vmatpush.msra.mxu0 %v1065
        %1093 = vmatpush.msra.mxu0 %v1064
        %1094 = vmatpush.msra.mxu0 %v1063
        %1095 = vmatpush.msra.mxu0 %v1062
        %1096 = vmatpush.msra.mxu0 %v1061
        %1097 = vmatmul.f32.gmra.mxu0 %v1060
        %v1098 = vpop.f32.mrf.mxu0
        %v1099 = vadd.f32 %v1079, %v1098
        %1100 = vdwg.mxu0
        %v1101 = vxor.u32 %v1099, 2147483648
        %v1102 = vmul.f32 %v1101, 1.442695
        %v1103 = vpow.pop %v1102
        %v1104 = vadd.f32 %v1103, 1.0
        %v1105 = vrcp.pop %v1104
        %v1106 = vmul.f32 %v1104, %v1105
        %v1107 = vsub.f32 1.0, %v1106
        %v1108 = vmul.f32 %v1105, %v1107
        %v1109 = vadd.f32 %v1105, %v1108
        %vm1110 = vweird.f32 %v1104
        %vm1111 = vweird.f32 %v1105
        %vm1112 = vmor %vm1110, %vm1111
        %v1113 = vsel %vm1112, %v1105, %v1109
        %v1114 = vand.u32 2147483647, %v1104
        %vm1115 = vcmp.eq.f32.partialorder %v1114, 8.507059e+37
        %v1116 = vand.u32 %v1104, 2147483648
        %v1117 = vor.u32 1.1754944e-38, %v1116
        %v1118 = vsel %vm1115, %v1117, %v1113
        %v1119 = vmul.f32 1.0, %v1118
        %1120 = vst.msk [vmem:[%s757] sm:$0xff] %vm998, %v991
        %1121 = vst.msk [vmem:[%s764] sm:$0xff] %vm998, %v952
        %1122 = vst.msk [vmem:[%s771] sm:$0xff] %vm998, %v984
        %1123 = vst.msk [vmem:[%s778] sm:$0xff] %vm804, %v1119
        %s1124 = sand.u32 %s443, 1
        %s1125 = scalar_lea.sflag [#allocation4], %s1124
        %s1126 = sand.u32 %s443, 1
        %s1127 = smul.addr %s1126, 8
        %s1128 = scalar_lea.vmem [#allocation11], %s1127
        %s1129 = sand.u32 %s47, 1
        %s1130 = scalar_lea.sflag [#allocation13], %s1129
        %s1131 = sand.u32 %s469, 1
        %s1132 = smul.addr %s1131, 8
        %s1133 = scalar_lea.vmem [#allocation12], %s1132
        %s1134 = sand.u32 %s47, 1
        %s1135 = scalar_lea.sflag [#allocation13], %s1134
        %s1136 = sand.u32 %s495, 1
        %s1137 = smul.addr %s1136, 8
        %s1138 = scalar_lea.vmem [#allocation14], %s1137
        %s1139 = sand.u32 %s521, 1
        %s1140 = scalar_lea.sflag [#allocation16], %s1139
        %s1141 = sand.u32 %s521, 1
        %s1142 = smul.addr %s1141, 8
        %s1143 = scalar_lea.vmem [#allocation15], %s1142
        // Predicated region
        $region113: #{tpu_custom_call.1} parent=91 // pred_check
          %p1144 = pneg %p453
        $region114: #{tpu_custom_call.1} parent=91 // pred_check_branch
          %1146 = sbr.rel (%p1144) target = $region116
        $region115: #{tpu_custom_call.1} parent=91 // pred_region
          %1148 = vsyncadd %s1125, 0
          %s1149 = smul.addr %s47, 8
          %s1150 = scalar_lea.hbm %s18, %s1149
          %s1152 = sshll.u32 %s1128, 4
          %s1153 = int_to_ptr.vmem [resolvable:$true] %s1152
          %s1154 = sshll.u32 %s1150, 4
          %s1155 = int_to_ptr.hbm [resolvable:$true] %s1154
          %1157 = dma.vmem_to_hbm [thread:$0]  %s1153, 128, %s1155, %s1125
        $region116: #{tpu_custom_call.1} parent=91 // pred_fallthru
          _
        // Predicated region
        $region117: #{tpu_custom_call.1} parent=91 // pred_check
          %p1158 = pneg %p479
        $region118: #{tpu_custom_call.1} parent=91 // pred_check_branch
          %1160 = sbr.rel (%p1158) target = $region120
        $region119: #{tpu_custom_call.1} parent=91 // pred_region
          %1162 = vsyncadd %s1130, 0
          %s1163 = smul.addr %s47, 8
          %s1164 = scalar_lea.hbm %s19, %s1163
          %s1166 = sshll.u32 %s1133, 4
          %s1167 = int_to_ptr.vmem [resolvable:$true] %s1166
          %s1168 = sshll.u32 %s1164, 4
          %s1169 = int_to_ptr.hbm [resolvable:$true] %s1168
          %1171 = dma.vmem_to_hbm [thread:$0]  %s1167, 128, %s1169, %s1130
        $region120: #{tpu_custom_call.1} parent=91 // pred_fallthru
          _
        // Predicated region
        $region121: #{tpu_custom_call.1} parent=91 // pred_check
          %p1172 = pneg %p505
        $region122: #{tpu_custom_call.1} parent=91 // pred_check_branch
          %1174 = sbr.rel (%p1172) target = $region124
        $region123: #{tpu_custom_call.1} parent=91 // pred_region
          %1176 = vsyncadd %s1135, 0
          %s1177 = smul.addr %s47, 8
          %s1178 = scalar_lea.hbm %s20, %s1177
          %s1180 = sshll.u32 %s1138, 4
          %s1181 = int_to_ptr.vmem [resolvable:$true] %s1180
          %s1182 = sshll.u32 %s1178, 4
          %s1183 = int_to_ptr.hbm [resolvable:$true] %s1182
          %1185 = dma.vmem_to_hbm [thread:$0]  %s1181, 128, %s1183, %s1135
        $region124: #{tpu_custom_call.1} parent=91 // pred_fallthru
          _
        // Predicated region
        $region125: #{tpu_custom_call.1} parent=91 // pred_check
          %p1186 = pneg %p531
        $region126: #{tpu_custom_call.1} parent=91 // pred_check_branch
          %1188 = sbr.rel (%p1186) target = $region128
        $region127: #{tpu_custom_call.1} parent=91 // pred_region
          %1190 = vsyncadd %s1140, 0
          %s1191 = smul.addr %s47, 8
          %s1192 = scalar_lea.hbm %s21, %s1191
          %s1194 = sshll.u32 %s1143, 4
          %s1195 = int_to_ptr.vmem [resolvable:$true] %s1194
          %s1196 = sshll.u32 %s1192, 4
          %s1197 = int_to_ptr.hbm [resolvable:$true] %s1196
          %1199 = dma.vmem_to_hbm [thread:$0]  %s1195, 128, %s1197, %s1140
        $region128: #{tpu_custom_call.1} parent=91 // pred_fallthru
          _
      $region92: #{tpu_custom_call.1} parent=5 // pred_fallthru
        _
      %p1200 = scmp.le.s32.totalorder 2, %s42
      // Predicated region
      $region129: #{tpu_custom_call.1} parent=5 // pred_check
        %p1201 = pneg %p1200
      $region130: #{tpu_custom_call.1} parent=5 // pred_check_branch
        %1203 = sbr.rel (%p1201) target = $region132
      $region131: #{tpu_custom_call.1} parent=5 // pred_region
        %s1204 = ssub.s32 %s42, 2
        // Predicated region
        $region133: #{tpu_custom_call.1} parent=131 // pred_check
          %p1205 = pneg %p459
        $region134: #{tpu_custom_call.1} parent=131 // pred_check_branch
          %1207 = sbr.rel (%p1205) target = $region136
        $region135: #{tpu_custom_call.1} parent=131 // pred_region
          %s1208 = sand.u32 %s444, 1
          %s1209 = scalar_lea.sflag [#allocation4], %s1208
          %s1210 = sand.u32 %s444, 1
          %s1211 = smul.addr %s1210, 8
          %s1212 = scalar_lea.vmem [#allocation11], %s1211
          %1214 = dma.done %s1209, 128
        $region136: #{tpu_custom_call.1} parent=131 // pred_fallthru
          _
        // Predicated region
        $region137: #{tpu_custom_call.1} parent=131 // pred_check
          %p1215 = pneg %p485
        $region138: #{tpu_custom_call.1} parent=131 // pred_check_branch
          %1217 = sbr.rel (%p1215) target = $region140
        $region139: #{tpu_custom_call.1} parent=131 // pred_region
          %s1218 = sand.u32 %s48, 1
          %s1219 = scalar_lea.sflag [#allocation13], %s1218
          %s1220 = sand.u32 %s470, 1
          %s1221 = smul.addr %s1220, 8
          %s1222 = scalar_lea.vmem [#allocation12], %s1221
          %1224 = dma.done %s1219, 128
        $region140: #{tpu_custom_call.1} parent=131 // pred_fallthru
          _
        // Predicated region
        $region141: #{tpu_custom_call.1} parent=131 // pred_check
          %p1225 = pneg %p511
        $region142: #{tpu_custom_call.1} parent=131 // pred_check_branch
          %1227 = sbr.rel (%p1225) target = $region144
        $region143: #{tpu_custom_call.1} parent=131 // pred_region
          %s1228 = sand.u32 %s48, 1
          %s1229 = scalar_lea.sflag [#allocation13], %s1228
          %s1230 = sand.u32 %s496, 1
          %s1231 = smul.addr %s1230, 8
          %s1232 = scalar_lea.vmem [#allocation14], %s1231
          %1234 = dma.done %s1229, 128
        $region144: #{tpu_custom_call.1} parent=131 // pred_fallthru
          _
        // Predicated region
        $region145: #{tpu_custom_call.1} parent=131 // pred_check
          %p1235 = pneg %p537
        $region146: #{tpu_custom_call.1} parent=131 // pred_check_branch
          %1237 = sbr.rel (%p1235) target = $region148
        $region147: #{tpu_custom_call.1} parent=131 // pred_region
          %s1238 = sand.u32 %s522, 1
          %s1239 = scalar_lea.sflag [#allocation16], %s1238
          %s1240 = sand.u32 %s522, 1
          %s1241 = smul.addr %s1240, 8
          %s1242 = scalar_lea.vmem [#allocation15], %s1241
          %1244 = dma.done %s1239, 128
        $region148: #{tpu_custom_call.1} parent=131 // pred_fallthru
          _
      $region132: #{tpu_custom_call.1} parent=5 // pred_fallthru
        _
    $region6: #{tpu_custom_call.1} parent=1 // loop_footer
      %s46 = sadd.s32 1, %s42
    $region7: #{tpu_custom_call.1} parent=1 // loop_footer_branch
      %41 = sbr.rel target = $region3
    $region8: #{tpu_custom_call.1} parent=1 // loop_exit
      _
    %1245 = vsyncpa [#allocation3], 1
    %s1246 = scalar_lea.sflag [#allocation3], 1
    %1247 = vsyncpa %s1246, 1
    %1248 = vsyncpa [#allocation6], 1
    %1249 = vsyncpa [#allocation9], 1
    %1250 = vsyncpa [#allocation4], 1
    %s1251 = scalar_lea.sflag [#allocation4], 1
    %1252 = vsyncpa %s1251, 1
    %1253 = vsyncpa [#allocation13], 1
    %s1254 = scalar_lea.sflag [#allocation13], 1
    %1255 = vsyncpa %s1254, 1
    %1256 = vsyncpa [#allocation16], 1
    %s1257 = scalar_lea.sflag [#allocation16], 1
    %1258 = vsyncpa %s1257, 1

</llo_original>
